<compile_context>
chip_gen: v7x
topology: tpu7x:2x2x1
jax: 0.10.0
libtpu: 0.0.40
codegen_flags: <defaults>
</compile_context>

<pallas_src>
import functools

import jax
import jax.numpy as jnp
from jax import lax
from jax.experimental import pallas as pl
from jax.experimental.pallas import tpu as pltpu

KSIZE = 7
PAD = KSIZE // 2          # 3
HALO = 8                  # halo fetched at the 8-row sublane granule (>= PAD)
LANES = 128


def _spatial_attention_kernel(x_ref, xtop_ref, xbot_ref, w_ref, b_ref, o_ref,
                              *, C, TH, W):
    """One (batch, row-band) grid step.

    x_ref    : (1, C, TH, W)   the band's own rows
    xtop_ref : (1, C, 8, W)    8-row block just above the band (edge-clamped)
    xbot_ref : (1, C, 8, W)    8-row block just below the band (edge-clamped)
    w_ref    : (2*K*K,) SMEM   conv weight, layout [ci, kh, kw]
    b_ref    : (1,)     SMEM   conv bias
    o_ref    : (1, C, TH, W)
    """
    f32 = jnp.float32
    h = pl.program_id(1)
    n_h = pl.num_programs(1)
    unroll_c = min(C, 8)

    # ---- fused channel mean/max: ONE unrolled pass over C ----
    def red_body(c, carry):
        s_m, m_m, s_t, m_t, s_b, m_b = carry
        xm = x_ref[0, c].astype(f32)        # (TH, W)
        xt = xtop_ref[0, c].astype(f32)     # (8, W)
        xb = xbot_ref[0, c].astype(f32)     # (8, W)
        return (s_m + xm, jnp.maximum(m_m, xm),
                s_t + xt, jnp.maximum(m_t, xt),
                s_b + xb, jnp.maximum(m_b, xb))

    init = (jnp.zeros((TH, W), f32), jnp.full((TH, W), -jnp.inf, f32),
            jnp.zeros((HALO, W), f32), jnp.full((HALO, W), -jnp.inf, f32),
            jnp.zeros((HALO, W), f32), jnp.full((HALO, W), -jnp.inf, f32))
    s_m, m_m, s_t, m_t, s_b, m_b = lax.fori_loop(
        0, C, red_body, init, unroll=unroll_c)

    inv_c = jnp.float32(1.0 / C)
    zero_h = jnp.zeros((HALO, W), f32)
    top_live = h > 0                        # halo rows outside the image -> zero
    bot_live = h < n_h - 1                  # (exact Conv2d zero padding)

    # plane rows: [0,8) = block above, [8, 8+TH) = own rows, [8+TH, 8+TH+8) = below
    avg_plane = jnp.concatenate(
        [jnp.where(top_live, s_t * inv_c, zero_h),
         s_m * inv_c,
         jnp.where(bot_live, s_b * inv_c, zero_h)], axis=0)
    max_plane = jnp.concatenate(
        [jnp.where(top_live, m_t, zero_h),
         m_m,
         jnp.where(bot_live, m_b, zero_h)], axis=0)
    planes = (avg_plane, max_plane)         # each (TH + 16, W) f32

    # ---- 7x7 conv: kw-outer (one rolled+masked plane live), kh-inner with the
    #      row window sliced BEFORE the multiply; hoisted edge masks; 4 accs ----
    R = TH + 2 * HALO
    col = lax.broadcasted_iota(jnp.int32, (R, W), 1)
    masks = {}
    for kw in range(KSIZE):
        d = kw - PAD                        # tap reads column x + d
        if d > 0:
            masks[kw] = col < (W - d)       # source col >= W -> zero pad
        elif d < 0:
            masks[kw] = col >= (-d)         # source col < 0  -> zero pad

    row_off = HALO - PAD                    # output row y reads plane row y + kh + row_off
    accs = [jnp.zeros((TH, W), f32) for _ in range(4)]
    for ci in range(2):                     # 0 -> avg plane, 1 -> max plane (cat order)
        plane = planes[ci]
        base = ci * KSIZE * KSIZE
        for kw in range(KSIZE):
            d = kw - PAD
            if d == 0:
                r = plane
            else:
                r = pltpu.roll(plane, (PAD - kw) % W, axis=1)   # r[:, x] = plane[:, x + d]
                r = jnp.where(masks[kw], r, 0.0)
            for kh in range(KSIZE):
                win = lax.slice(r, (kh + row_off, 0), (kh + row_off + TH, W))
                accs[kh % 4] = accs[kh % 4] + win * w_ref[base + kh * KSIZE + kw]

    conv = (accs[0] + accs[1]) + (accs[2] + accs[3]) + b_ref[0]
    attn = jax.nn.sigmoid(conv)             # (TH, W) f32

    # ---- out = x * attn in f32 (cast only the product), streamed per channel ----
    def mul_body(c, carry):
        o_ref[0, c] = (x_ref[0, c].astype(f32) * attn).astype(o_ref.dtype)
        return carry

    lax.fori_loop(0, C, mul_body, 0, unroll=unroll_c)


def _vmem_limit_bytes():
    """Generation-aware VMEM limit: ~3/4 of physical per-core VMEM."""
    cap = None
    try:
        cap = int(pltpu.get_tpu_info().vmem_capacity_bytes)
    except Exception:
        cap = None
    if not cap or cap <= 0:
        cap = 64 * 1024 * 1024              # conservative fallback (v7x per-TC VMEM)
    return max(16 * 1024 * 1024, (cap // 4) * 3)


def _auto_tile_h(C, H, W, itemsize, budget, *, force_multi_band):
    """Largest TH (multiple of 8, dividing H) whose working set fits `budget`.

    If `force_multi_band`, never return TH == H (keep >= 2 grid steps so both
    v7x TensorCores get work when N == 1; near-free on single-TC v5e/v6e).
    """
    best = 8
    th = 8
    while th <= H:
        if H % th == 0 and not (force_multi_band and th == H and H > 8):
            x_blocks = 2 * 2 * C * th * W * itemsize       # in + out, double buffered
            halo = 2 * 2 * C * HALO * W * itemsize         # two halo inputs, 2 buffers
            work = 14 * (th + 2 * HALO) * W * 4            # f32 planes/rolled/acc/masks
            if x_blocks + halo + work <= budget:
                best = th
        th += 8
    return best


def _spatial_attention_call(x, weight, bias, tile_h):
    N, C, H, W = x.shape
    vmem_limit = _vmem_limit_bytes()
    if tile_h is None:
        tile_h = _auto_tile_h(C, H, W, x.dtype.itemsize,
                              budget=vmem_limit - 2 * 1024 * 1024,
                              force_multi_band=(N == 1))
    assert tile_h % 8 == 0 and H % tile_h == 0, \
        "tile_h must be a multiple of 8 dividing H"
    n_h = H // tile_h
    blk8 = tile_h // 8                      # 8-row blocks per band
    nblk8 = H // 8                          # 8-row blocks in the image

    w_flat = weight.astype(jnp.float32).reshape(-1)        # (98,) flat SMEM
    b = bias.astype(jnp.float32).reshape(-1)               # (1,)

    kernel = functools.partial(_spatial_attention_kernel, C=C, TH=tile_h, W=W)

    return pl.pallas_call(
        kernel,
        out_shape=jax.ShapeDtypeStruct((N, C, H, W), x.dtype),
        grid=(N, n_h),
        in_specs=[
            # the band's own rows
            pl.BlockSpec((1, C, tile_h, W), lambda n, h: (n, 0, h, 0)),
            # 8-row block just above / below the band (clamped at image edges;
            # out-of-image halo rows are zeroed in-kernel)
            pl.BlockSpec((1, C, HALO, W),
                         lambda n, h: (n, 0, jnp.maximum(h * blk8 - 1, 0), 0)),
            pl.BlockSpec((1, C, HALO, W),
                         lambda n, h: (n, 0, jnp.minimum((h + 1) * blk8, nblk8 - 1), 0)),
            pl.BlockSpec(memory_space=pltpu.SMEM),          # (98,) conv weight
            pl.BlockSpec(memory_space=pltpu.SMEM),          # (1,)  conv bias
        ],
        out_specs=pl.BlockSpec((1, C, tile_h, W), lambda n, h: (n, 0, h, 0)),
        compiler_params=pltpu.CompilerParams(
            dimension_semantics=("parallel", "parallel"),
            vmem_limit_bytes=vmem_limit,
        ),
    )(x, x, x, w_flat, b)


def spatial_attention_pallas(x, weight, bias, *, tile_h=None, pad_lanes=None):
    """SpatialAttention forward.  x: (N,C,H,W); weight: (1,2,7,7); bias: (1,)."""
    N, C, H, W = x.shape
    if H % 8 != 0:
        raise ValueError("H must be a multiple of 8 (TPU sublane granule).")
    w_pad = -(-W // LANES) * LANES
    if pad_lanes is None:
        # Lane-dense (128-multiple) last dim is the biggest single store lever;
        # pad only when the extra HBM traffic is modest (< 25%).
        pad_lanes = (W % LANES != 0) and (w_pad * 4 <= W * 5)
    if pad_lanes and W % LANES != 0:
        # Zero-padded columns give avg = max = 0 planes, identical to the conv's
        # zero padding, so true-column outputs are exact and padding is sliced off.
        xp = jnp.pad(x, ((0, 0), (0, 0), (0, 0), (0, w_pad - W)))
        return _spatial_attention_call(xp, weight, bias, tile_h)[..., :W]
    return _spatial_attention_call(x, weight, bias, tile_h)


def spatial_attention_ref(x, weight, bias):
    """Pure-JAX reference (mirrors the PyTorch forward) for validation."""
    avg = jnp.mean(x, axis=1, keepdims=True)
    mx = jnp.max(x, axis=1, keepdims=True)
    attn = jnp.concatenate([avg, mx], axis=1)               # (N, 2, H, W)
    attn = lax.conv_general_dilated(
        attn, weight, window_strides=(1, 1), padding=[(PAD, PAD), (PAD, PAD)],
        dimension_numbers=("NCHW", "OIHW", "NCHW"),
        precision=lax.Precision.HIGHEST)
    attn = attn + bias.reshape(1, 1, 1, 1)
    return x * jax.nn.sigmoid(attn)


if __name__ == "__main__":
    key = jax.random.PRNGKey(0)
    kx, kw_, kb, kx2 = jax.random.split(key, 4)

    # Deterministic Conv2d(2, 1, 7, padding=3) parameters.
    fan_in = 2 * KSIZE * KSIZE
    bound = 1.0 / (fan_in ** 0.5)
    weight = jax.random.uniform(kw_, (1, 2, KSIZE, KSIZE), jnp.float32,
                                minval=-bound, maxval=bound)
    bias = jax.random.uniform(kb, (1,), jnp.float32, minval=-bound, maxval=bound)

    # Primary small shape: auto tile (exercises the generation-aware VMEM budget
    # and the single-band / edge-clamped-halo path).
    N, C, H, W = 2, 4, 16, 16
    x = jax.random.normal(kx, (N, C, H, W), dtype=jnp.float32)
    out = jax.block_until_ready(spatial_attention_pallas(x, weight, bias))
    assert out.shape == (N, C, H, W)
    ref = spatial_attention_ref(x, weight, bias)
    err = float(jnp.max(jnp.abs(out - ref)))
    assert err < 1e-4, f"auto-tile case: mismatch vs JAX reference ({err})"

    # 3-band case (N=1) so an interior band with both halos live is validated too.
    x2 = jax.random.normal(kx2, (1, 3, 24, 16), dtype=jnp.float32)
    out2 = jax.block_until_ready(spatial_attention_pallas(x2, weight, bias, tile_h=8))
    ref2 = spatial_attention_ref(x2, weight, bias)
    err2 = float(jnp.max(jnp.abs(out2 - ref2)))
    assert err2 < 1e-4, f"3-band case: mismatch vs reference ({err2})"

    print("KERNEL_OK")
</pallas_src>

<mosaic_0001>
module attributes {stable_mosaic.version = 11 : i64} {
  func.func @_spatial_attention_kernel(%arg0: i32, %arg1: i32, %arg2: memref<1x4x16x16xf32, #tpu.memory_space<vmem>>, %arg3: memref<1x4x8x16xf32, #tpu.memory_space<vmem>>, %arg4: memref<1x4x8x16xf32, #tpu.memory_space<vmem>>, %arg5: memref<98xf32, #tpu.memory_space<smem>>, %arg6: memref<1xf32, #tpu.memory_space<smem>>, %arg7: memref<1x4x16x16xf32, #tpu.memory_space<vmem>>) attributes {dimension_semantics = [#tpu.dimension_semantics<parallel>, #tpu.dimension_semantics<parallel>], iteration_bounds = array<i64: 2, 1>, scalar_prefetch = 0 : i64, scratch_operands = 0 : i64, tpu.core_type = #tpu.core_type<tc>, window_params = [{transform_indices = @transform_0, window_bounds = array<i64: 1, 4, 16, 16>}, {transform_indices = @transform_1, window_bounds = array<i64: 1, 4, 8, 16>}, {transform_indices = @transform_2, window_bounds = array<i64: 1, 4, 8, 16>}, {transform_indices = @transform_3, window_bounds = array<i64: 98>}, {transform_indices = @transform_4, window_bounds = array<i64: 1>}, {transform_indices = @transform_5, window_bounds = array<i64: 1, 4, 16, 16>}]} {
    %cst = arith.constant 0.000000e+00 : f32
    %0 = vector.broadcast %cst : f32 to vector<16x16xf32>
    %cst_0 = arith.constant 0xFF800000 : f32
    %1 = vector.broadcast %cst_0 : f32 to vector<16x16xf32>
    %cst_1 = arith.constant 0.000000e+00 : f32
    %2 = vector.broadcast %cst_1 : f32 to vector<8x16xf32>
    %cst_2 = arith.constant 0xFF800000 : f32
    %3 = vector.broadcast %cst_2 : f32 to vector<8x16xf32>
    %cst_3 = arith.constant 0.000000e+00 : f32
    %4 = vector.broadcast %cst_3 : f32 to vector<8x16xf32>
    %cst_4 = arith.constant 0xFF800000 : f32
    %5 = vector.broadcast %cst_4 : f32 to vector<8x16xf32>
    %c0_i32 = arith.constant 0 : i32
    %c0 = arith.constant 0 : index
    %6 = arith.index_cast %c0_i32 : i32 to index
    %c0_5 = arith.constant 0 : index
    %c0_6 = arith.constant 0 : index
    %7 = vector.load %arg2[%c0, %6, %c0_5, %c0_6] : memref<1x4x16x16xf32, #tpu.memory_space<vmem>>, vector<1x1x16x16xf32>
    %8 = vector.shape_cast %7 : vector<1x1x16x16xf32> to vector<16x16xf32>
    %c0_7 = arith.constant 0 : index
    %9 = arith.index_cast %c0_i32 : i32 to index
    %c0_8 = arith.constant 0 : index
    %c0_9 = arith.constant 0 : index
    %10 = vector.load %arg3[%c0_7, %9, %c0_8, %c0_9] : memref<1x4x8x16xf32, #tpu.memory_space<vmem>>, vector<1x1x8x16xf32>
    %11 = vector.shape_cast %10 : vector<1x1x8x16xf32> to vector<8x16xf32>
    %c0_10 = arith.constant 0 : index
    %12 = arith.index_cast %c0_i32 : i32 to index
    %c0_11 = arith.constant 0 : index
    %c0_12 = arith.constant 0 : index
    %13 = vector.load %arg4[%c0_10, %12, %c0_11, %c0_12] : memref<1x4x8x16xf32, #tpu.memory_space<vmem>>, vector<1x1x8x16xf32>
    %14 = vector.shape_cast %13 : vector<1x1x8x16xf32> to vector<8x16xf32>
    %15 = arith.addf %0, %8 : vector<16x16xf32>
    %16 = arith.maximumf %1, %8 : vector<16x16xf32>
    %17 = arith.addf %2, %11 : vector<8x16xf32>
    %18 = arith.maximumf %3, %11 : vector<8x16xf32>
    %19 = arith.addf %4, %14 : vector<8x16xf32>
    %20 = arith.maximumf %5, %14 : vector<8x16xf32>
    %c1_i32 = arith.constant 1 : i32
    %c0_13 = arith.constant 0 : index
    %21 = arith.index_cast %c1_i32 : i32 to index
    %c0_14 = arith.constant 0 : index
    %c0_15 = arith.constant 0 : index
    %22 = vector.load %arg2[%c0_13, %21, %c0_14, %c0_15] : memref<1x4x16x16xf32, #tpu.memory_space<vmem>>, vector<1x1x16x16xf32>
    %23 = vector.shape_cast %22 : vector<1x1x16x16xf32> to vector<16x16xf32>
    %c0_16 = arith.constant 0 : index
    %24 = arith.index_cast %c1_i32 : i32 to index
    %c0_17 = arith.constant 0 : index
    %c0_18 = arith.constant 0 : index
    %25 = vector.load %arg3[%c0_16, %24, %c0_17, %c0_18] : memref<1x4x8x16xf32, #tpu.memory_space<vmem>>, vector<1x1x8x16xf32>
    %26 = vector.shape_cast %25 : vector<1x1x8x16xf32> to vector<8x16xf32>
    %c0_19 = arith.constant 0 : index
    %27 = arith.index_cast %c1_i32 : i32 to index
    %c0_20 = arith.constant 0 : index
    %c0_21 = arith.constant 0 : index
    %28 = vector.load %arg4[%c0_19, %27, %c0_20, %c0_21] : memref<1x4x8x16xf32, #tpu.memory_space<vmem>>, vector<1x1x8x16xf32>
    %29 = vector.shape_cast %28 : vector<1x1x8x16xf32> to vector<8x16xf32>
    %30 = arith.addf %15, %23 : vector<16x16xf32>
    %31 = arith.maximumf %16, %23 : vector<16x16xf32>
    %32 = arith.addf %17, %26 : vector<8x16xf32>
    %33 = arith.maximumf %18, %26 : vector<8x16xf32>
    %34 = arith.addf %19, %29 : vector<8x16xf32>
    %35 = arith.maximumf %20, %29 : vector<8x16xf32>
    %c2_i32 = arith.constant 2 : i32
    %c0_22 = arith.constant 0 : index
    %36 = arith.index_cast %c2_i32 : i32 to index
    %c0_23 = arith.constant 0 : index
    %c0_24 = arith.constant 0 : index
    %37 = vector.load %arg2[%c0_22, %36, %c0_23, %c0_24] : memref<1x4x16x16xf32, #tpu.memory_space<vmem>>, vector<1x1x16x16xf32>
    %38 = vector.shape_cast %37 : vector<1x1x16x16xf32> to vector<16x16xf32>
    %c0_25 = arith.constant 0 : index
    %39 = arith.index_cast %c2_i32 : i32 to index
    %c0_26 = arith.constant 0 : index
    %c0_27 = arith.constant 0 : index
    %40 = vector.load %arg3[%c0_25, %39, %c0_26, %c0_27] : memref<1x4x8x16xf32, #tpu.memory_space<vmem>>, vector<1x1x8x16xf32>
    %41 = vector.shape_cast %40 : vector<1x1x8x16xf32> to vector<8x16xf32>
    %c0_28 = arith.constant 0 : index
    %42 = arith.index_cast %c2_i32 : i32 to index
    %c0_29 = arith.constant 0 : index
    %c0_30 = arith.constant 0 : index
    %43 = vector.load %arg4[%c0_28, %42, %c0_29, %c0_30] : memref<1x4x8x16xf32, #tpu.memory_space<vmem>>, vector<1x1x8x16xf32>
    %44 = vector.shape_cast %43 : vector<1x1x8x16xf32> to vector<8x16xf32>
    %45 = arith.addf %30, %38 : vector<16x16xf32>
    %46 = arith.maximumf %31, %38 : vector<16x16xf32>
    %47 = arith.addf %32, %41 : vector<8x16xf32>
    %48 = arith.maximumf %33, %41 : vector<8x16xf32>
    %49 = arith.addf %34, %44 : vector<8x16xf32>
    %50 = arith.maximumf %35, %44 : vector<8x16xf32>
    %c3_i32 = arith.constant 3 : i32
    %c0_31 = arith.constant 0 : index
    %51 = arith.index_cast %c3_i32 : i32 to index
    %c0_32 = arith.constant 0 : index
    %c0_33 = arith.constant 0 : index
    %52 = vector.load %arg2[%c0_31, %51, %c0_32, %c0_33] : memref<1x4x16x16xf32, #tpu.memory_space<vmem>>, vector<1x1x16x16xf32>
    %53 = vector.shape_cast %52 : vector<1x1x16x16xf32> to vector<16x16xf32>
    %c0_34 = arith.constant 0 : index
    %54 = arith.index_cast %c3_i32 : i32 to index
    %c0_35 = arith.constant 0 : index
    %c0_36 = arith.constant 0 : index
    %55 = vector.load %arg3[%c0_34, %54, %c0_35, %c0_36] : memref<1x4x8x16xf32, #tpu.memory_space<vmem>>, vector<1x1x8x16xf32>
    %56 = vector.shape_cast %55 : vector<1x1x8x16xf32> to vector<8x16xf32>
    %c0_37 = arith.constant 0 : index
    %57 = arith.index_cast %c3_i32 : i32 to index
    %c0_38 = arith.constant 0 : index
    %c0_39 = arith.constant 0 : index
    %58 = vector.load %arg4[%c0_37, %57, %c0_38, %c0_39] : memref<1x4x8x16xf32, #tpu.memory_space<vmem>>, vector<1x1x8x16xf32>
    %59 = vector.shape_cast %58 : vector<1x1x8x16xf32> to vector<8x16xf32>
    %60 = arith.addf %45, %53 : vector<16x16xf32>
    %61 = arith.maximumf %46, %53 : vector<16x16xf32>
    %62 = arith.addf %47, %56 : vector<8x16xf32>
    %63 = arith.maximumf %48, %56 : vector<8x16xf32>
    %64 = arith.addf %49, %59 : vector<8x16xf32>
    %65 = arith.maximumf %50, %59 : vector<8x16xf32>
    %c4_i32 = arith.constant 4 : i32
    %cst_40 = arith.constant 0.000000e+00 : f32
    %66 = vector.broadcast %cst_40 : f32 to vector<8x16xf32>
    %c0_i32_41 = arith.constant 0 : i32
    %67 = arith.cmpi sgt, %arg1, %c0_i32_41 : i32
    %c0_i32_42 = arith.constant 0 : i32
    %68 = arith.cmpi slt, %arg1, %c0_i32_42 : i32
    %cst_43 = arith.constant 2.500000e-01 : f32
    %69 = vector.broadcast %cst_43 : f32 to vector<8x16xf32>
    %70 = arith.mulf %62, %69 : vector<8x16xf32>
    %71 = arith.select %67, %70, %66 : vector<8x16xf32>
    %cst_44 = arith.constant 2.500000e-01 : f32
    %72 = vector.broadcast %cst_44 : f32 to vector<16x16xf32>
    %73 = arith.mulf %60, %72 : vector<16x16xf32>
    %cst_45 = arith.constant 2.500000e-01 : f32
    %74 = vector.broadcast %cst_45 : f32 to vector<8x16xf32>
    %75 = arith.mulf %64, %74 : vector<8x16xf32>
    %76 = arith.select %68, %75, %66 : vector<8x16xf32>
    %77 = tpu.concatenate %71, %73, %76 in 0 : vector<8x16xf32>, vector<16x16xf32>, vector<8x16xf32> -> vector<32x16xf32>
    %78 = arith.select %67, %63, %66 : vector<8x16xf32>
    %79 = arith.select %68, %65, %66 : vector<8x16xf32>
    %80 = tpu.concatenate %78, %61, %79 in 0 : vector<8x16xf32>, vector<16x16xf32>, vector<8x16xf32> -> vector<32x16xf32>
    %81 = tpu.iota {dimensions = array<i32: 1>} : vector<32x16xi32>
    %c3_i32_46 = arith.constant 3 : i32
    %82 = vector.broadcast %c3_i32_46 : i32 to vector<32x16xi32>
    %83 = arith.cmpi sge, %81, %82 : vector<32x16xi32>
    %c2_i32_47 = arith.constant 2 : i32
    %84 = vector.broadcast %c2_i32_47 : i32 to vector<32x16xi32>
    %85 = arith.cmpi sge, %81, %84 : vector<32x16xi32>
    %c1_i32_48 = arith.constant 1 : i32
    %86 = vector.broadcast %c1_i32_48 : i32 to vector<32x16xi32>
    %87 = arith.cmpi sge, %81, %86 : vector<32x16xi32>
    %c15_i32 = arith.constant 15 : i32
    %88 = vector.broadcast %c15_i32 : i32 to vector<32x16xi32>
    %89 = arith.cmpi slt, %81, %88 : vector<32x16xi32>
    %c14_i32 = arith.constant 14 : i32
    %90 = vector.broadcast %c14_i32 : i32 to vector<32x16xi32>
    %91 = arith.cmpi slt, %81, %90 : vector<32x16xi32>
    %c13_i32 = arith.constant 13 : i32
    %92 = vector.broadcast %c13_i32 : i32 to vector<32x16xi32>
    %93 = arith.cmpi slt, %81, %92 : vector<32x16xi32>
    %cst_49 = arith.constant 0.000000e+00 : f32
    %94 = vector.broadcast %cst_49 : f32 to vector<16x16xf32>
    %cst_50 = arith.constant 0.000000e+00 : f32
    %95 = vector.broadcast %cst_50 : f32 to vector<16x16xf32>
    %cst_51 = arith.constant 0.000000e+00 : f32
    %96 = vector.broadcast %cst_51 : f32 to vector<16x16xf32>
    %cst_52 = arith.constant 0.000000e+00 : f32
    %97 = vector.broadcast %cst_52 : f32 to vector<16x16xf32>
    %c3_i32_53 = arith.constant 3 : i32
    %98 = tpu.dynamic_rotate %77 by %c3_i32_53 dim 1 : vector<32x16xf32>, i32 -> vector<32x16xf32>
    %cst_54 = arith.constant 0.000000e+00 : f32
    %99 = vector.broadcast %cst_54 : f32 to vector<32x16xf32>
    %100 = arith.select %83, %98, %99 : vector<32x16xi1>, vector<32x16xf32>
    %101 = vector.extract_strided_slice %100 {offsets = [5, 0], sizes = [16, 16], strides = [1, 1]} : vector<32x16xf32> to vector<16x16xf32>
    %c0_55 = arith.constant 0 : index
    %102 = memref.load %arg5[%c0_55] : memref<98xf32, #tpu.memory_space<smem>>
    %103 = vector.broadcast %102 : f32 to vector<16x16xf32>
    %104 = arith.mulf %101, %103 : vector<16x16xf32>
    %105 = arith.addf %94, %104 : vector<16x16xf32>
    %106 = vector.extract_strided_slice %100 {offsets = [6, 0], sizes = [16, 16], strides = [1, 1]} : vector<32x16xf32> to vector<16x16xf32>
    %c7 = arith.constant 7 : index
    %107 = memref.load %arg5[%c7] : memref<98xf32, #tpu.memory_space<smem>>
    %108 = vector.broadcast %107 : f32 to vector<16x16xf32>
    %109 = arith.mulf %106, %108 : vector<16x16xf32>
    %110 = arith.addf %95, %109 : vector<16x16xf32>
    %111 = vector.extract_strided_slice %100 {offsets = [7, 0], sizes = [16, 16], strides = [1, 1]} : vector<32x16xf32> to vector<16x16xf32>
    %c14 = arith.constant 14 : index
    %112 = memref.load %arg5[%c14] : memref<98xf32, #tpu.memory_space<smem>>
    %113 = vector.broadcast %112 : f32 to vector<16x16xf32>
    %114 = arith.mulf %111, %113 : vector<16x16xf32>
    %115 = arith.addf %96, %114 : vector<16x16xf32>
    %116 = vector.extract_strided_slice %100 {offsets = [8, 0], sizes = [16, 16], strides = [1, 1]} : vector<32x16xf32> to vector<16x16xf32>
    %c21 = arith.constant 21 : index
    %117 = memref.load %arg5[%c21] : memref<98xf32, #tpu.memory_space<smem>>
    %118 = vector.broadcast %117 : f32 to vector<16x16xf32>
    %119 = arith.mulf %116, %118 : vector<16x16xf32>
    %120 = arith.addf %97, %119 : vector<16x16xf32>
    %121 = vector.extract_strided_slice %100 {offsets = [9, 0], sizes = [16, 16], strides = [1, 1]} : vector<32x16xf32> to vector<16x16xf32>
    %c28 = arith.constant 28 : index
    %122 = memref.load %arg5[%c28] : memref<98xf32, #tpu.memory_space<smem>>
    %123 = vector.broadcast %122 : f32 to vector<16x16xf32>
    %124 = arith.mulf %121, %123 : vector<16x16xf32>
    %125 = arith.addf %105, %124 : vector<16x16xf32>
    %126 = vector.extract_strided_slice %100 {offsets = [10, 0], sizes = [16, 16], strides = [1, 1]} : vector<32x16xf32> to vector<16x16xf32>
    %c35 = arith.constant 35 : index
    %127 = memref.load %arg5[%c35] : memref<98xf32, #tpu.memory_space<smem>>
    %128 = vector.broadcast %127 : f32 to vector<16x16xf32>
    %129 = arith.mulf %126, %128 : vector<16x16xf32>
    %130 = arith.addf %110, %129 : vector<16x16xf32>
    %131 = vector.extract_strided_slice %100 {offsets = [11, 0], sizes = [16, 16], strides = [1, 1]} : vector<32x16xf32> to vector<16x16xf32>
    %c42 = arith.constant 42 : index
    %132 = memref.load %arg5[%c42] : memref<98xf32, #tpu.memory_space<smem>>
    %133 = vector.broadcast %132 : f32 to vector<16x16xf32>
    %134 = arith.mulf %131, %133 : vector<16x16xf32>
    %135 = arith.addf %115, %134 : vector<16x16xf32>
    %c2_i32_56 = arith.constant 2 : i32
    %136 = tpu.dynamic_rotate %77 by %c2_i32_56 dim 1 : vector<32x16xf32>, i32 -> vector<32x16xf32>
    %cst_57 = arith.constant 0.000000e+00 : f32
    %137 = vector.broadcast %cst_57 : f32 to vector<32x16xf32>
    %138 = arith.select %85, %136, %137 : vector<32x16xi1>, vector<32x16xf32>
    %139 = vector.extract_strided_slice %138 {offsets = [5, 0], sizes = [16, 16], strides = [1, 1]} : vector<32x16xf32> to vector<16x16xf32>
    %c1 = arith.constant 1 : index
    %140 = memref.load %arg5[%c1] : memref<98xf32, #tpu.memory_space<smem>>
    %141 = vector.broadcast %140 : f32 to vector<16x16xf32>
    %142 = arith.mulf %139, %141 : vector<16x16xf32>
    %143 = arith.addf %125, %142 : vector<16x16xf32>
    %144 = vector.extract_strided_slice %138 {offsets = [6, 0], sizes = [16, 16], strides = [1, 1]} : vector<32x16xf32> to vector<16x16xf32>
    %c8 = arith.constant 8 : index
    %145 = memref.load %arg5[%c8] : memref<98xf32, #tpu.memory_space<smem>>
    %146 = vector.broadcast %145 : f32 to vector<16x16xf32>
    %147 = arith.mulf %144, %146 : vector<16x16xf32>
    %148 = arith.addf %130, %147 : vector<16x16xf32>
    %149 = vector.extract_strided_slice %138 {offsets = [7, 0], sizes = [16, 16], strides = [1, 1]} : vector<32x16xf32> to vector<16x16xf32>
    %c15 = arith.constant 15 : index
    %150 = memref.load %arg5[%c15] : memref<98xf32, #tpu.memory_space<smem>>
    %151 = vector.broadcast %150 : f32 to vector<16x16xf32>
    %152 = arith.mulf %149, %151 : vector<16x16xf32>
    %153 = arith.addf %135, %152 : vector<16x16xf32>
    %154 = vector.extract_strided_slice %138 {offsets = [8, 0], sizes = [16, 16], strides = [1, 1]} : vector<32x16xf32> to vector<16x16xf32>
    %c22 = arith.constant 22 : index
    %155 = memref.load %arg5[%c22] : memref<98xf32, #tpu.memory_space<smem>>
    %156 = vector.broadcast %155 : f32 to vector<16x16xf32>
    %157 = arith.mulf %154, %156 : vector<16x16xf32>
    %158 = arith.addf %120, %157 : vector<16x16xf32>
    %159 = vector.extract_strided_slice %138 {offsets = [9, 0], sizes = [16, 16], strides = [1, 1]} : vector<32x16xf32> to vector<16x16xf32>
    %c29 = arith.constant 29 : index
    %160 = memref.load %arg5[%c29] : memref<98xf32, #tpu.memory_space<smem>>
    %161 = vector.broadcast %160 : f32 to vector<16x16xf32>
    %162 = arith.mulf %159, %161 : vector<16x16xf32>
    %163 = arith.addf %143, %162 : vector<16x16xf32>
    %164 = vector.extract_strided_slice %138 {offsets = [10, 0], sizes = [16, 16], strides = [1, 1]} : vector<32x16xf32> to vector<16x16xf32>
    %c36 = arith.constant 36 : index
    %165 = memref.load %arg5[%c36] : memref<98xf32, #tpu.memory_space<smem>>
    %166 = vector.broadcast %165 : f32 to vector<16x16xf32>
    %167 = arith.mulf %164, %166 : vector<16x16xf32>
    %168 = arith.addf %148, %167 : vector<16x16xf32>
    %169 = vector.extract_strided_slice %138 {offsets = [11, 0], sizes = [16, 16], strides = [1, 1]} : vector<32x16xf32> to vector<16x16xf32>
    %c43 = arith.constant 43 : index
    %170 = memref.load %arg5[%c43] : memref<98xf32, #tpu.memory_space<smem>>
    %171 = vector.broadcast %170 : f32 to vector<16x16xf32>
    %172 = arith.mulf %169, %171 : vector<16x16xf32>
    %173 = arith.addf %153, %172 : vector<16x16xf32>
    %c1_i32_58 = arith.constant 1 : i32
    %174 = tpu.dynamic_rotate %77 by %c1_i32_58 dim 1 : vector<32x16xf32>, i32 -> vector<32x16xf32>
    %cst_59 = arith.constant 0.000000e+00 : f32
    %175 = vector.broadcast %cst_59 : f32 to vector<32x16xf32>
    %176 = arith.select %87, %174, %175 : vector<32x16xi1>, vector<32x16xf32>
    %177 = vector.extract_strided_slice %176 {offsets = [5, 0], sizes = [16, 16], strides = [1, 1]} : vector<32x16xf32> to vector<16x16xf32>
    %c2 = arith.constant 2 : index
    %178 = memref.load %arg5[%c2] : memref<98xf32, #tpu.memory_space<smem>>
    %179 = vector.broadcast %178 : f32 to vector<16x16xf32>
    %180 = arith.mulf %177, %179 : vector<16x16xf32>
    %181 = arith.addf %163, %180 : vector<16x16xf32>
    %182 = vector.extract_strided_slice %176 {offsets = [6, 0], sizes = [16, 16], strides = [1, 1]} : vector<32x16xf32> to vector<16x16xf32>
    %c9 = arith.constant 9 : index
    %183 = memref.load %arg5[%c9] : memref<98xf32, #tpu.memory_space<smem>>
    %184 = vector.broadcast %183 : f32 to vector<16x16xf32>
    %185 = arith.mulf %182, %184 : vector<16x16xf32>
    %186 = arith.addf %168, %185 : vector<16x16xf32>
    %187 = vector.extract_strided_slice %176 {offsets = [7, 0], sizes = [16, 16], strides = [1, 1]} : vector<32x16xf32> to vector<16x16xf32>
    %c16 = arith.constant 16 : index
    %188 = memref.load %arg5[%c16] : memref<98xf32, #tpu.memory_space<smem>>
    %189 = vector.broadcast %188 : f32 to vector<16x16xf32>
    %190 = arith.mulf %187, %189 : vector<16x16xf32>
    %191 = arith.addf %173, %190 : vector<16x16xf32>
    %192 = vector.extract_strided_slice %176 {offsets = [8, 0], sizes = [16, 16], strides = [1, 1]} : vector<32x16xf32> to vector<16x16xf32>
    %c23 = arith.constant 23 : index
    %193 = memref.load %arg5[%c23] : memref<98xf32, #tpu.memory_space<smem>>
    %194 = vector.broadcast %193 : f32 to vector<16x16xf32>
    %195 = arith.mulf %192, %194 : vector<16x16xf32>
    %196 = arith.addf %158, %195 : vector<16x16xf32>
    %197 = vector.extract_strided_slice %176 {offsets = [9, 0], sizes = [16, 16], strides = [1, 1]} : vector<32x16xf32> to vector<16x16xf32>
    %c30 = arith.constant 30 : index
    %198 = memref.load %arg5[%c30] : memref<98xf32, #tpu.memory_space<smem>>
    %199 = vector.broadcast %198 : f32 to vector<16x16xf32>
    %200 = arith.mulf %197, %199 : vector<16x16xf32>
    %201 = arith.addf %181, %200 : vector<16x16xf32>
    %202 = vector.extract_strided_slice %176 {offsets = [10, 0], sizes = [16, 16], strides = [1, 1]} : vector<32x16xf32> to vector<16x16xf32>
    %c37 = arith.constant 37 : index
    %203 = memref.load %arg5[%c37] : memref<98xf32, #tpu.memory_space<smem>>
    %204 = vector.broadcast %203 : f32 to vector<16x16xf32>
    %205 = arith.mulf %202, %204 : vector<16x16xf32>
    %206 = arith.addf %186, %205 : vector<16x16xf32>
    %207 = vector.extract_strided_slice %176 {offsets = [11, 0], sizes = [16, 16], strides = [1, 1]} : vector<32x16xf32> to vector<16x16xf32>
    %c44 = arith.constant 44 : index
    %208 = memref.load %arg5[%c44] : memref<98xf32, #tpu.memory_space<smem>>
    %209 = vector.broadcast %208 : f32 to vector<16x16xf32>
    %210 = arith.mulf %207, %209 : vector<16x16xf32>
    %211 = arith.addf %191, %210 : vector<16x16xf32>
    %212 = vector.extract_strided_slice %77 {offsets = [5, 0], sizes = [16, 16], strides = [1, 1]} : vector<32x16xf32> to vector<16x16xf32>
    %c3 = arith.constant 3 : index
    %213 = memref.load %arg5[%c3] : memref<98xf32, #tpu.memory_space<smem>>
    %214 = vector.broadcast %213 : f32 to vector<16x16xf32>
    %215 = arith.mulf %212, %214 : vector<16x16xf32>
    %216 = arith.addf %201, %215 : vector<16x16xf32>
    %217 = vector.extract_strided_slice %77 {offsets = [6, 0], sizes = [16, 16], strides = [1, 1]} : vector<32x16xf32> to vector<16x16xf32>
    %c10 = arith.constant 10 : index
    %218 = memref.load %arg5[%c10] : memref<98xf32, #tpu.memory_space<smem>>
    %219 = vector.broadcast %218 : f32 to vector<16x16xf32>
    %220 = arith.mulf %217, %219 : vector<16x16xf32>
    %221 = arith.addf %206, %220 : vector<16x16xf32>
    %222 = vector.extract_strided_slice %77 {offsets = [7, 0], sizes = [16, 16], strides = [1, 1]} : vector<32x16xf32> to vector<16x16xf32>
    %c17 = arith.constant 17 : index
    %223 = memref.load %arg5[%c17] : memref<98xf32, #tpu.memory_space<smem>>
    %224 = vector.broadcast %223 : f32 to vector<16x16xf32>
    %225 = arith.mulf %222, %224 : vector<16x16xf32>
    %226 = arith.addf %211, %225 : vector<16x16xf32>
    %227 = vector.extract_strided_slice %77 {offsets = [8, 0], sizes = [16, 16], strides = [1, 1]} : vector<32x16xf32> to vector<16x16xf32>
    %c24 = arith.constant 24 : index
    %228 = memref.load %arg5[%c24] : memref<98xf32, #tpu.memory_space<smem>>
    %229 = vector.broadcast %228 : f32 to vector<16x16xf32>
    %230 = arith.mulf %227, %229 : vector<16x16xf32>
    %231 = arith.addf %196, %230 : vector<16x16xf32>
    %232 = vector.extract_strided_slice %77 {offsets = [9, 0], sizes = [16, 16], strides = [1, 1]} : vector<32x16xf32> to vector<16x16xf32>
    %c31 = arith.constant 31 : index
    %233 = memref.load %arg5[%c31] : memref<98xf32, #tpu.memory_space<smem>>
    %234 = vector.broadcast %233 : f32 to vector<16x16xf32>
    %235 = arith.mulf %232, %234 : vector<16x16xf32>
    %236 = arith.addf %216, %235 : vector<16x16xf32>
    %237 = vector.extract_strided_slice %77 {offsets = [10, 0], sizes = [16, 16], strides = [1, 1]} : vector<32x16xf32> to vector<16x16xf32>
    %c38 = arith.constant 38 : index
    %238 = memref.load %arg5[%c38] : memref<98xf32, #tpu.memory_space<smem>>
    %239 = vector.broadcast %238 : f32 to vector<16x16xf32>
    %240 = arith.mulf %237, %239 : vector<16x16xf32>
    %241 = arith.addf %221, %240 : vector<16x16xf32>
    %242 = vector.extract_strided_slice %77 {offsets = [11, 0], sizes = [16, 16], strides = [1, 1]} : vector<32x16xf32> to vector<16x16xf32>
    %c45 = arith.constant 45 : index
    %243 = memref.load %arg5[%c45] : memref<98xf32, #tpu.memory_space<smem>>
    %244 = vector.broadcast %243 : f32 to vector<16x16xf32>
    %245 = arith.mulf %242, %244 : vector<16x16xf32>
    %246 = arith.addf %226, %245 : vector<16x16xf32>
    %c15_i32_60 = arith.constant 15 : i32
    %247 = tpu.dynamic_rotate %77 by %c15_i32_60 dim 1 : vector<32x16xf32>, i32 -> vector<32x16xf32>
    %cst_61 = arith.constant 0.000000e+00 : f32
    %248 = vector.broadcast %cst_61 : f32 to vector<32x16xf32>
    %249 = arith.select %89, %247, %248 : vector<32x16xi1>, vector<32x16xf32>
    %250 = vector.extract_strided_slice %249 {offsets = [5, 0], sizes = [16, 16], strides = [1, 1]} : vector<32x16xf32> to vector<16x16xf32>
    %c4 = arith.constant 4 : index
    %251 = memref.load %arg5[%c4] : memref<98xf32, #tpu.memory_space<smem>>
    %252 = vector.broadcast %251 : f32 to vector<16x16xf32>
    %253 = arith.mulf %250, %252 : vector<16x16xf32>
    %254 = arith.addf %236, %253 : vector<16x16xf32>
    %255 = vector.extract_strided_slice %249 {offsets = [6, 0], sizes = [16, 16], strides = [1, 1]} : vector<32x16xf32> to vector<16x16xf32>
    %c11 = arith.constant 11 : index
    %256 = memref.load %arg5[%c11] : memref<98xf32, #tpu.memory_space<smem>>
    %257 = vector.broadcast %256 : f32 to vector<16x16xf32>
    %258 = arith.mulf %255, %257 : vector<16x16xf32>
    %259 = arith.addf %241, %258 : vector<16x16xf32>
    %260 = vector.extract_strided_slice %249 {offsets = [7, 0], sizes = [16, 16], strides = [1, 1]} : vector<32x16xf32> to vector<16x16xf32>
    %c18 = arith.constant 18 : index
    %261 = memref.load %arg5[%c18] : memref<98xf32, #tpu.memory_space<smem>>
    %262 = vector.broadcast %261 : f32 to vector<16x16xf32>
    %263 = arith.mulf %260, %262 : vector<16x16xf32>
    %264 = arith.addf %246, %263 : vector<16x16xf32>
    %265 = vector.extract_strided_slice %249 {offsets = [8, 0], sizes = [16, 16], strides = [1, 1]} : vector<32x16xf32> to vector<16x16xf32>
    %c25 = arith.constant 25 : index
    %266 = memref.load %arg5[%c25] : memref<98xf32, #tpu.memory_space<smem>>
    %267 = vector.broadcast %266 : f32 to vector<16x16xf32>
    %268 = arith.mulf %265, %267 : vector<16x16xf32>
    %269 = arith.addf %231, %268 : vector<16x16xf32>
    %270 = vector.extract_strided_slice %249 {offsets = [9, 0], sizes = [16, 16], strides = [1, 1]} : vector<32x16xf32> to vector<16x16xf32>
    %c32 = arith.constant 32 : index
    %271 = memref.load %arg5[%c32] : memref<98xf32, #tpu.memory_space<smem>>
    %272 = vector.broadcast %271 : f32 to vector<16x16xf32>
    %273 = arith.mulf %270, %272 : vector<16x16xf32>
    %274 = arith.addf %254, %273 : vector<16x16xf32>
    %275 = vector.extract_strided_slice %249 {offsets = [10, 0], sizes = [16, 16], strides = [1, 1]} : vector<32x16xf32> to vector<16x16xf32>
    %c39 = arith.constant 39 : index
    %276 = memref.load %arg5[%c39] : memref<98xf32, #tpu.memory_space<smem>>
    %277 = vector.broadcast %276 : f32 to vector<16x16xf32>
    %278 = arith.mulf %275, %277 : vector<16x16xf32>
    %279 = arith.addf %259, %278 : vector<16x16xf32>
    %280 = vector.extract_strided_slice %249 {offsets = [11, 0], sizes = [16, 16], strides = [1, 1]} : vector<32x16xf32> to vector<16x16xf32>
    %c46 = arith.constant 46 : index
    %281 = memref.load %arg5[%c46] : memref<98xf32, #tpu.memory_space<smem>>
    %282 = vector.broadcast %281 : f32 to vector<16x16xf32>
    %283 = arith.mulf %280, %282 : vector<16x16xf32>
    %284 = arith.addf %264, %283 : vector<16x16xf32>
    %c14_i32_62 = arith.constant 14 : i32
    %285 = tpu.dynamic_rotate %77 by %c14_i32_62 dim 1 : vector<32x16xf32>, i32 -> vector<32x16xf32>
    %cst_63 = arith.constant 0.000000e+00 : f32
    %286 = vector.broadcast %cst_63 : f32 to vector<32x16xf32>
    %287 = arith.select %91, %285, %286 : vector<32x16xi1>, vector<32x16xf32>
    %288 = vector.extract_strided_slice %287 {offsets = [5, 0], sizes = [16, 16], strides = [1, 1]} : vector<32x16xf32> to vector<16x16xf32>
    %c5 = arith.constant 5 : index
    %289 = memref.load %arg5[%c5] : memref<98xf32, #tpu.memory_space<smem>>
    %290 = vector.broadcast %289 : f32 to vector<16x16xf32>
    %291 = arith.mulf %288, %290 : vector<16x16xf32>
    %292 = arith.addf %274, %291 : vector<16x16xf32>
    %293 = vector.extract_strided_slice %287 {offsets = [6, 0], sizes = [16, 16], strides = [1, 1]} : vector<32x16xf32> to vector<16x16xf32>
    %c12 = arith.constant 12 : index
    %294 = memref.load %arg5[%c12] : memref<98xf32, #tpu.memory_space<smem>>
    %295 = vector.broadcast %294 : f32 to vector<16x16xf32>
    %296 = arith.mulf %293, %295 : vector<16x16xf32>
    %297 = arith.addf %279, %296 : vector<16x16xf32>
    %298 = vector.extract_strided_slice %287 {offsets = [7, 0], sizes = [16, 16], strides = [1, 1]} : vector<32x16xf32> to vector<16x16xf32>
    %c19 = arith.constant 19 : index
    %299 = memref.load %arg5[%c19] : memref<98xf32, #tpu.memory_space<smem>>
    %300 = vector.broadcast %299 : f32 to vector<16x16xf32>
    %301 = arith.mulf %298, %300 : vector<16x16xf32>
    %302 = arith.addf %284, %301 : vector<16x16xf32>
    %303 = vector.extract_strided_slice %287 {offsets = [8, 0], sizes = [16, 16], strides = [1, 1]} : vector<32x16xf32> to vector<16x16xf32>
    %c26 = arith.constant 26 : index
    %304 = memref.load %arg5[%c26] : memref<98xf32, #tpu.memory_space<smem>>
    %305 = vector.broadcast %304 : f32 to vector<16x16xf32>
    %306 = arith.mulf %303, %305 : vector<16x16xf32>
    %307 = arith.addf %269, %306 : vector<16x16xf32>
    %308 = vector.extract_strided_slice %287 {offsets = [9, 0], sizes = [16, 16], strides = [1, 1]} : vector<32x16xf32> to vector<16x16xf32>
    %c33 = arith.constant 33 : index
    %309 = memref.load %arg5[%c33] : memref<98xf32, #tpu.memory_space<smem>>
    %310 = vector.broadcast %309 : f32 to vector<16x16xf32>
    %311 = arith.mulf %308, %310 : vector<16x16xf32>
    %312 = arith.addf %292, %311 : vector<16x16xf32>
    %313 = vector.extract_strided_slice %287 {offsets = [10, 0], sizes = [16, 16], strides = [1, 1]} : vector<32x16xf32> to vector<16x16xf32>
    %c40 = arith.constant 40 : index
    %314 = memref.load %arg5[%c40] : memref<98xf32, #tpu.memory_space<smem>>
    %315 = vector.broadcast %314 : f32 to vector<16x16xf32>
    %316 = arith.mulf %313, %315 : vector<16x16xf32>
    %317 = arith.addf %297, %316 : vector<16x16xf32>
    %318 = vector.extract_strided_slice %287 {offsets = [11, 0], sizes = [16, 16], strides = [1, 1]} : vector<32x16xf32> to vector<16x16xf32>
    %c47 = arith.constant 47 : index
    %319 = memref.load %arg5[%c47] : memref<98xf32, #tpu.memory_space<smem>>
    %320 = vector.broadcast %319 : f32 to vector<16x16xf32>
    %321 = arith.mulf %318, %320 : vector<16x16xf32>
    %322 = arith.addf %302, %321 : vector<16x16xf32>
    %c13_i32_64 = arith.constant 13 : i32
    %323 = tpu.dynamic_rotate %77 by %c13_i32_64 dim 1 : vector<32x16xf32>, i32 -> vector<32x16xf32>
    %cst_65 = arith.constant 0.000000e+00 : f32
    %324 = vector.broadcast %cst_65 : f32 to vector<32x16xf32>
    %325 = arith.select %93, %323, %324 : vector<32x16xi1>, vector<32x16xf32>
    %326 = vector.extract_strided_slice %325 {offsets = [5, 0], sizes = [16, 16], strides = [1, 1]} : vector<32x16xf32> to vector<16x16xf32>
    %c6 = arith.constant 6 : index
    %327 = memref.load %arg5[%c6] : memref<98xf32, #tpu.memory_space<smem>>
    %328 = vector.broadcast %327 : f32 to vector<16x16xf32>
    %329 = arith.mulf %326, %328 : vector<16x16xf32>
    %330 = arith.addf %312, %329 : vector<16x16xf32>
    %331 = vector.extract_strided_slice %325 {offsets = [6, 0], sizes = [16, 16], strides = [1, 1]} : vector<32x16xf32> to vector<16x16xf32>
    %c13 = arith.constant 13 : index
    %332 = memref.load %arg5[%c13] : memref<98xf32, #tpu.memory_space<smem>>
    %333 = vector.broadcast %332 : f32 to vector<16x16xf32>
    %334 = arith.mulf %331, %333 : vector<16x16xf32>
    %335 = arith.addf %317, %334 : vector<16x16xf32>
    %336 = vector.extract_strided_slice %325 {offsets = [7, 0], sizes = [16, 16], strides = [1, 1]} : vector<32x16xf32> to vector<16x16xf32>
    %c20 = arith.constant 20 : index
    %337 = memref.load %arg5[%c20] : memref<98xf32, #tpu.memory_space<smem>>
    %338 = vector.broadcast %337 : f32 to vector<16x16xf32>
    %339 = arith.mulf %336, %338 : vector<16x16xf32>
    %340 = arith.addf %322, %339 : vector<16x16xf32>
    %341 = vector.extract_strided_slice %325 {offsets = [8, 0], sizes = [16, 16], strides = [1, 1]} : vector<32x16xf32> to vector<16x16xf32>
    %c27 = arith.constant 27 : index
    %342 = memref.load %arg5[%c27] : memref<98xf32, #tpu.memory_space<smem>>
    %343 = vector.broadcast %342 : f32 to vector<16x16xf32>
    %344 = arith.mulf %341, %343 : vector<16x16xf32>
    %345 = arith.addf %307, %344 : vector<16x16xf32>
    %346 = vector.extract_strided_slice %325 {offsets = [9, 0], sizes = [16, 16], strides = [1, 1]} : vector<32x16xf32> to vector<16x16xf32>
    %c34 = arith.constant 34 : index
    %347 = memref.load %arg5[%c34] : memref<98xf32, #tpu.memory_space<smem>>
    %348 = vector.broadcast %347 : f32 to vector<16x16xf32>
    %349 = arith.mulf %346, %348 : vector<16x16xf32>
    %350 = arith.addf %330, %349 : vector<16x16xf32>
    %351 = vector.extract_strided_slice %325 {offsets = [10, 0], sizes = [16, 16], strides = [1, 1]} : vector<32x16xf32> to vector<16x16xf32>
    %c41 = arith.constant 41 : index
    %352 = memref.load %arg5[%c41] : memref<98xf32, #tpu.memory_space<smem>>
    %353 = vector.broadcast %352 : f32 to vector<16x16xf32>
    %354 = arith.mulf %351, %353 : vector<16x16xf32>
    %355 = arith.addf %335, %354 : vector<16x16xf32>
    %356 = vector.extract_strided_slice %325 {offsets = [11, 0], sizes = [16, 16], strides = [1, 1]} : vector<32x16xf32> to vector<16x16xf32>
    %c48 = arith.constant 48 : index
    %357 = memref.load %arg5[%c48] : memref<98xf32, #tpu.memory_space<smem>>
    %358 = vector.broadcast %357 : f32 to vector<16x16xf32>
    %359 = arith.mulf %356, %358 : vector<16x16xf32>
    %360 = arith.addf %340, %359 : vector<16x16xf32>
    %c3_i32_66 = arith.constant 3 : i32
    %361 = tpu.dynamic_rotate %80 by %c3_i32_66 dim 1 : vector<32x16xf32>, i32 -> vector<32x16xf32>
    %cst_67 = arith.constant 0.000000e+00 : f32
    %362 = vector.broadcast %cst_67 : f32 to vector<32x16xf32>
    %363 = arith.select %83, %361, %362 : vector<32x16xi1>, vector<32x16xf32>
    %364 = vector.extract_strided_slice %363 {offsets = [5, 0], sizes = [16, 16], strides = [1, 1]} : vector<32x16xf32> to vector<16x16xf32>
    %c49 = arith.constant 49 : index
    %365 = memref.load %arg5[%c49] : memref<98xf32, #tpu.memory_space<smem>>
    %366 = vector.broadcast %365 : f32 to vector<16x16xf32>
    %367 = arith.mulf %364, %366 : vector<16x16xf32>
    %368 = arith.addf %350, %367 : vector<16x16xf32>
    %369 = vector.extract_strided_slice %363 {offsets = [6, 0], sizes = [16, 16], strides = [1, 1]} : vector<32x16xf32> to vector<16x16xf32>
    %c56 = arith.constant 56 : index
    %370 = memref.load %arg5[%c56] : memref<98xf32, #tpu.memory_space<smem>>
    %371 = vector.broadcast %370 : f32 to vector<16x16xf32>
    %372 = arith.mulf %369, %371 : vector<16x16xf32>
    %373 = arith.addf %355, %372 : vector<16x16xf32>
    %374 = vector.extract_strided_slice %363 {offsets = [7, 0], sizes = [16, 16], strides = [1, 1]} : vector<32x16xf32> to vector<16x16xf32>
    %c63 = arith.constant 63 : index
    %375 = memref.load %arg5[%c63] : memref<98xf32, #tpu.memory_space<smem>>
    %376 = vector.broadcast %375 : f32 to vector<16x16xf32>
    %377 = arith.mulf %374, %376 : vector<16x16xf32>
    %378 = arith.addf %360, %377 : vector<16x16xf32>
    %379 = vector.extract_strided_slice %363 {offsets = [8, 0], sizes = [16, 16], strides = [1, 1]} : vector<32x16xf32> to vector<16x16xf32>
    %c70 = arith.constant 70 : index
    %380 = memref.load %arg5[%c70] : memref<98xf32, #tpu.memory_space<smem>>
    %381 = vector.broadcast %380 : f32 to vector<16x16xf32>
    %382 = arith.mulf %379, %381 : vector<16x16xf32>
    %383 = arith.addf %345, %382 : vector<16x16xf32>
    %384 = vector.extract_strided_slice %363 {offsets = [9, 0], sizes = [16, 16], strides = [1, 1]} : vector<32x16xf32> to vector<16x16xf32>
    %c77 = arith.constant 77 : index
    %385 = memref.load %arg5[%c77] : memref<98xf32, #tpu.memory_space<smem>>
    %386 = vector.broadcast %385 : f32 to vector<16x16xf32>
    %387 = arith.mulf %384, %386 : vector<16x16xf32>
    %388 = arith.addf %368, %387 : vector<16x16xf32>
    %389 = vector.extract_strided_slice %363 {offsets = [10, 0], sizes = [16, 16], strides = [1, 1]} : vector<32x16xf32> to vector<16x16xf32>
    %c84 = arith.constant 84 : index
    %390 = memref.load %arg5[%c84] : memref<98xf32, #tpu.memory_space<smem>>
    %391 = vector.broadcast %390 : f32 to vector<16x16xf32>
    %392 = arith.mulf %389, %391 : vector<16x16xf32>
    %393 = arith.addf %373, %392 : vector<16x16xf32>
    %394 = vector.extract_strided_slice %363 {offsets = [11, 0], sizes = [16, 16], strides = [1, 1]} : vector<32x16xf32> to vector<16x16xf32>
    %c91 = arith.constant 91 : index
    %395 = memref.load %arg5[%c91] : memref<98xf32, #tpu.memory_space<smem>>
    %396 = vector.broadcast %395 : f32 to vector<16x16xf32>
    %397 = arith.mulf %394, %396 : vector<16x16xf32>
    %398 = arith.addf %378, %397 : vector<16x16xf32>
    %c2_i32_68 = arith.constant 2 : i32
    %399 = tpu.dynamic_rotate %80 by %c2_i32_68 dim 1 : vector<32x16xf32>, i32 -> vector<32x16xf32>
    %cst_69 = arith.constant 0.000000e+00 : f32
    %400 = vector.broadcast %cst_69 : f32 to vector<32x16xf32>
    %401 = arith.select %85, %399, %400 : vector<32x16xi1>, vector<32x16xf32>
    %402 = vector.extract_strided_slice %401 {offsets = [5, 0], sizes = [16, 16], strides = [1, 1]} : vector<32x16xf32> to vector<16x16xf32>
    %c50 = arith.constant 50 : index
    %403 = memref.load %arg5[%c50] : memref<98xf32, #tpu.memory_space<smem>>
    %404 = vector.broadcast %403 : f32 to vector<16x16xf32>
    %405 = arith.mulf %402, %404 : vector<16x16xf32>
    %406 = arith.addf %388, %405 : vector<16x16xf32>
    %407 = vector.extract_strided_slice %401 {offsets = [6, 0], sizes = [16, 16], strides = [1, 1]} : vector<32x16xf32> to vector<16x16xf32>
    %c57 = arith.constant 57 : index
    %408 = memref.load %arg5[%c57] : memref<98xf32, #tpu.memory_space<smem>>
    %409 = vector.broadcast %408 : f32 to vector<16x16xf32>
    %410 = arith.mulf %407, %409 : vector<16x16xf32>
    %411 = arith.addf %393, %410 : vector<16x16xf32>
    %412 = vector.extract_strided_slice %401 {offsets = [7, 0], sizes = [16, 16], strides = [1, 1]} : vector<32x16xf32> to vector<16x16xf32>
    %c64 = arith.constant 64 : index
    %413 = memref.load %arg5[%c64] : memref<98xf32, #tpu.memory_space<smem>>
    %414 = vector.broadcast %413 : f32 to vector<16x16xf32>
    %415 = arith.mulf %412, %414 : vector<16x16xf32>
    %416 = arith.addf %398, %415 : vector<16x16xf32>
    %417 = vector.extract_strided_slice %401 {offsets = [8, 0], sizes = [16, 16], strides = [1, 1]} : vector<32x16xf32> to vector<16x16xf32>
    %c71 = arith.constant 71 : index
    %418 = memref.load %arg5[%c71] : memref<98xf32, #tpu.memory_space<smem>>
    %419 = vector.broadcast %418 : f32 to vector<16x16xf32>
    %420 = arith.mulf %417, %419 : vector<16x16xf32>
    %421 = arith.addf %383, %420 : vector<16x16xf32>
    %422 = vector.extract_strided_slice %401 {offsets = [9, 0], sizes = [16, 16], strides = [1, 1]} : vector<32x16xf32> to vector<16x16xf32>
    %c78 = arith.constant 78 : index
    %423 = memref.load %arg5[%c78] : memref<98xf32, #tpu.memory_space<smem>>
    %424 = vector.broadcast %423 : f32 to vector<16x16xf32>
    %425 = arith.mulf %422, %424 : vector<16x16xf32>
    %426 = arith.addf %406, %425 : vector<16x16xf32>
    %427 = vector.extract_strided_slice %401 {offsets = [10, 0], sizes = [16, 16], strides = [1, 1]} : vector<32x16xf32> to vector<16x16xf32>
    %c85 = arith.constant 85 : index
    %428 = memref.load %arg5[%c85] : memref<98xf32, #tpu.memory_space<smem>>
    %429 = vector.broadcast %428 : f32 to vector<16x16xf32>
    %430 = arith.mulf %427, %429 : vector<16x16xf32>
    %431 = arith.addf %411, %430 : vector<16x16xf32>
    %432 = vector.extract_strided_slice %401 {offsets = [11, 0], sizes = [16, 16], strides = [1, 1]} : vector<32x16xf32> to vector<16x16xf32>
    %c92 = arith.constant 92 : index
    %433 = memref.load %arg5[%c92] : memref<98xf32, #tpu.memory_space<smem>>
    %434 = vector.broadcast %433 : f32 to vector<16x16xf32>
    %435 = arith.mulf %432, %434 : vector<16x16xf32>
    %436 = arith.addf %416, %435 : vector<16x16xf32>
    %c1_i32_70 = arith.constant 1 : i32
    %437 = tpu.dynamic_rotate %80 by %c1_i32_70 dim 1 : vector<32x16xf32>, i32 -> vector<32x16xf32>
    %cst_71 = arith.constant 0.000000e+00 : f32
    %438 = vector.broadcast %cst_71 : f32 to vector<32x16xf32>
    %439 = arith.select %87, %437, %438 : vector<32x16xi1>, vector<32x16xf32>
    %440 = vector.extract_strided_slice %439 {offsets = [5, 0], sizes = [16, 16], strides = [1, 1]} : vector<32x16xf32> to vector<16x16xf32>
    %c51 = arith.constant 51 : index
    %441 = memref.load %arg5[%c51] : memref<98xf32, #tpu.memory_space<smem>>
    %442 = vector.broadcast %441 : f32 to vector<16x16xf32>
    %443 = arith.mulf %440, %442 : vector<16x16xf32>
    %444 = arith.addf %426, %443 : vector<16x16xf32>
    %445 = vector.extract_strided_slice %439 {offsets = [6, 0], sizes = [16, 16], strides = [1, 1]} : vector<32x16xf32> to vector<16x16xf32>
    %c58 = arith.constant 58 : index
    %446 = memref.load %arg5[%c58] : memref<98xf32, #tpu.memory_space<smem>>
    %447 = vector.broadcast %446 : f32 to vector<16x16xf32>
    %448 = arith.mulf %445, %447 : vector<16x16xf32>
    %449 = arith.addf %431, %448 : vector<16x16xf32>
    %450 = vector.extract_strided_slice %439 {offsets = [7, 0], sizes = [16, 16], strides = [1, 1]} : vector<32x16xf32> to vector<16x16xf32>
    %c65 = arith.constant 65 : index
    %451 = memref.load %arg5[%c65] : memref<98xf32, #tpu.memory_space<smem>>
    %452 = vector.broadcast %451 : f32 to vector<16x16xf32>
    %453 = arith.mulf %450, %452 : vector<16x16xf32>
    %454 = arith.addf %436, %453 : vector<16x16xf32>
    %455 = vector.extract_strided_slice %439 {offsets = [8, 0], sizes = [16, 16], strides = [1, 1]} : vector<32x16xf32> to vector<16x16xf32>
    %c72 = arith.constant 72 : index
    %456 = memref.load %arg5[%c72] : memref<98xf32, #tpu.memory_space<smem>>
    %457 = vector.broadcast %456 : f32 to vector<16x16xf32>
    %458 = arith.mulf %455, %457 : vector<16x16xf32>
    %459 = arith.addf %421, %458 : vector<16x16xf32>
    %460 = vector.extract_strided_slice %439 {offsets = [9, 0], sizes = [16, 16], strides = [1, 1]} : vector<32x16xf32> to vector<16x16xf32>
    %c79 = arith.constant 79 : index
    %461 = memref.load %arg5[%c79] : memref<98xf32, #tpu.memory_space<smem>>
    %462 = vector.broadcast %461 : f32 to vector<16x16xf32>
    %463 = arith.mulf %460, %462 : vector<16x16xf32>
    %464 = arith.addf %444, %463 : vector<16x16xf32>
    %465 = vector.extract_strided_slice %439 {offsets = [10, 0], sizes = [16, 16], strides = [1, 1]} : vector<32x16xf32> to vector<16x16xf32>
    %c86 = arith.constant 86 : index
    %466 = memref.load %arg5[%c86] : memref<98xf32, #tpu.memory_space<smem>>
    %467 = vector.broadcast %466 : f32 to vector<16x16xf32>
    %468 = arith.mulf %465, %467 : vector<16x16xf32>
    %469 = arith.addf %449, %468 : vector<16x16xf32>
    %470 = vector.extract_strided_slice %439 {offsets = [11, 0], sizes = [16, 16], strides = [1, 1]} : vector<32x16xf32> to vector<16x16xf32>
    %c93 = arith.constant 93 : index
    %471 = memref.load %arg5[%c93] : memref<98xf32, #tpu.memory_space<smem>>
    %472 = vector.broadcast %471 : f32 to vector<16x16xf32>
    %473 = arith.mulf %470, %472 : vector<16x16xf32>
    %474 = arith.addf %454, %473 : vector<16x16xf32>
    %475 = vector.extract_strided_slice %80 {offsets = [5, 0], sizes = [16, 16], strides = [1, 1]} : vector<32x16xf32> to vector<16x16xf32>
    %c52 = arith.constant 52 : index
    %476 = memref.load %arg5[%c52] : memref<98xf32, #tpu.memory_space<smem>>
    %477 = vector.broadcast %476 : f32 to vector<16x16xf32>
    %478 = arith.mulf %475, %477 : vector<16x16xf32>
    %479 = arith.addf %464, %478 : vector<16x16xf32>
    %480 = vector.extract_strided_slice %80 {offsets = [6, 0], sizes = [16, 16], strides = [1, 1]} : vector<32x16xf32> to vector<16x16xf32>
    %c59 = arith.constant 59 : index
    %481 = memref.load %arg5[%c59] : memref<98xf32, #tpu.memory_space<smem>>
    %482 = vector.broadcast %481 : f32 to vector<16x16xf32>
    %483 = arith.mulf %480, %482 : vector<16x16xf32>
    %484 = arith.addf %469, %483 : vector<16x16xf32>
    %485 = vector.extract_strided_slice %80 {offsets = [7, 0], sizes = [16, 16], strides = [1, 1]} : vector<32x16xf32> to vector<16x16xf32>
    %c66 = arith.constant 66 : index
    %486 = memref.load %arg5[%c66] : memref<98xf32, #tpu.memory_space<smem>>
    %487 = vector.broadcast %486 : f32 to vector<16x16xf32>
    %488 = arith.mulf %485, %487 : vector<16x16xf32>
    %489 = arith.addf %474, %488 : vector<16x16xf32>
    %490 = vector.extract_strided_slice %80 {offsets = [8, 0], sizes = [16, 16], strides = [1, 1]} : vector<32x16xf32> to vector<16x16xf32>
    %c73 = arith.constant 73 : index
    %491 = memref.load %arg5[%c73] : memref<98xf32, #tpu.memory_space<smem>>
    %492 = vector.broadcast %491 : f32 to vector<16x16xf32>
    %493 = arith.mulf %490, %492 : vector<16x16xf32>
    %494 = arith.addf %459, %493 : vector<16x16xf32>
    %495 = vector.extract_strided_slice %80 {offsets = [9, 0], sizes = [16, 16], strides = [1, 1]} : vector<32x16xf32> to vector<16x16xf32>
    %c80 = arith.constant 80 : index
    %496 = memref.load %arg5[%c80] : memref<98xf32, #tpu.memory_space<smem>>
    %497 = vector.broadcast %496 : f32 to vector<16x16xf32>
    %498 = arith.mulf %495, %497 : vector<16x16xf32>
    %499 = arith.addf %479, %498 : vector<16x16xf32>
    %500 = vector.extract_strided_slice %80 {offsets = [10, 0], sizes = [16, 16], strides = [1, 1]} : vector<32x16xf32> to vector<16x16xf32>
    %c87 = arith.constant 87 : index
    %501 = memref.load %arg5[%c87] : memref<98xf32, #tpu.memory_space<smem>>
    %502 = vector.broadcast %501 : f32 to vector<16x16xf32>
    %503 = arith.mulf %500, %502 : vector<16x16xf32>
    %504 = arith.addf %484, %503 : vector<16x16xf32>
    %505 = vector.extract_strided_slice %80 {offsets = [11, 0], sizes = [16, 16], strides = [1, 1]} : vector<32x16xf32> to vector<16x16xf32>
    %c94 = arith.constant 94 : index
    %506 = memref.load %arg5[%c94] : memref<98xf32, #tpu.memory_space<smem>>
    %507 = vector.broadcast %506 : f32 to vector<16x16xf32>
    %508 = arith.mulf %505, %507 : vector<16x16xf32>
    %509 = arith.addf %489, %508 : vector<16x16xf32>
    %c15_i32_72 = arith.constant 15 : i32
    %510 = tpu.dynamic_rotate %80 by %c15_i32_72 dim 1 : vector<32x16xf32>, i32 -> vector<32x16xf32>
    %cst_73 = arith.constant 0.000000e+00 : f32
    %511 = vector.broadcast %cst_73 : f32 to vector<32x16xf32>
    %512 = arith.select %89, %510, %511 : vector<32x16xi1>, vector<32x16xf32>
    %513 = vector.extract_strided_slice %512 {offsets = [5, 0], sizes = [16, 16], strides = [1, 1]} : vector<32x16xf32> to vector<16x16xf32>
    %c53 = arith.constant 53 : index
    %514 = memref.load %arg5[%c53] : memref<98xf32, #tpu.memory_space<smem>>
    %515 = vector.broadcast %514 : f32 to vector<16x16xf32>
    %516 = arith.mulf %513, %515 : vector<16x16xf32>
    %517 = arith.addf %499, %516 : vector<16x16xf32>
    %518 = vector.extract_strided_slice %512 {offsets = [6, 0], sizes = [16, 16], strides = [1, 1]} : vector<32x16xf32> to vector<16x16xf32>
    %c60 = arith.constant 60 : index
    %519 = memref.load %arg5[%c60] : memref<98xf32, #tpu.memory_space<smem>>
    %520 = vector.broadcast %519 : f32 to vector<16x16xf32>
    %521 = arith.mulf %518, %520 : vector<16x16xf32>
    %522 = arith.addf %504, %521 : vector<16x16xf32>
    %523 = vector.extract_strided_slice %512 {offsets = [7, 0], sizes = [16, 16], strides = [1, 1]} : vector<32x16xf32> to vector<16x16xf32>
    %c67 = arith.constant 67 : index
    %524 = memref.load %arg5[%c67] : memref<98xf32, #tpu.memory_space<smem>>
    %525 = vector.broadcast %524 : f32 to vector<16x16xf32>
    %526 = arith.mulf %523, %525 : vector<16x16xf32>
    %527 = arith.addf %509, %526 : vector<16x16xf32>
    %528 = vector.extract_strided_slice %512 {offsets = [8, 0], sizes = [16, 16], strides = [1, 1]} : vector<32x16xf32> to vector<16x16xf32>
    %c74 = arith.constant 74 : index
    %529 = memref.load %arg5[%c74] : memref<98xf32, #tpu.memory_space<smem>>
    %530 = vector.broadcast %529 : f32 to vector<16x16xf32>
    %531 = arith.mulf %528, %530 : vector<16x16xf32>
    %532 = arith.addf %494, %531 : vector<16x16xf32>
    %533 = vector.extract_strided_slice %512 {offsets = [9, 0], sizes = [16, 16], strides = [1, 1]} : vector<32x16xf32> to vector<16x16xf32>
    %c81 = arith.constant 81 : index
    %534 = memref.load %arg5[%c81] : memref<98xf32, #tpu.memory_space<smem>>
    %535 = vector.broadcast %534 : f32 to vector<16x16xf32>
    %536 = arith.mulf %533, %535 : vector<16x16xf32>
    %537 = arith.addf %517, %536 : vector<16x16xf32>
    %538 = vector.extract_strided_slice %512 {offsets = [10, 0], sizes = [16, 16], strides = [1, 1]} : vector<32x16xf32> to vector<16x16xf32>
    %c88 = arith.constant 88 : index
    %539 = memref.load %arg5[%c88] : memref<98xf32, #tpu.memory_space<smem>>
    %540 = vector.broadcast %539 : f32 to vector<16x16xf32>
    %541 = arith.mulf %538, %540 : vector<16x16xf32>
    %542 = arith.addf %522, %541 : vector<16x16xf32>
    %543 = vector.extract_strided_slice %512 {offsets = [11, 0], sizes = [16, 16], strides = [1, 1]} : vector<32x16xf32> to vector<16x16xf32>
    %c95 = arith.constant 95 : index
    %544 = memref.load %arg5[%c95] : memref<98xf32, #tpu.memory_space<smem>>
    %545 = vector.broadcast %544 : f32 to vector<16x16xf32>
    %546 = arith.mulf %543, %545 : vector<16x16xf32>
    %547 = arith.addf %527, %546 : vector<16x16xf32>
    %c14_i32_74 = arith.constant 14 : i32
    %548 = tpu.dynamic_rotate %80 by %c14_i32_74 dim 1 : vector<32x16xf32>, i32 -> vector<32x16xf32>
    %cst_75 = arith.constant 0.000000e+00 : f32
    %549 = vector.broadcast %cst_75 : f32 to vector<32x16xf32>
    %550 = arith.select %91, %548, %549 : vector<32x16xi1>, vector<32x16xf32>
    %551 = vector.extract_strided_slice %550 {offsets = [5, 0], sizes = [16, 16], strides = [1, 1]} : vector<32x16xf32> to vector<16x16xf32>
    %c54 = arith.constant 54 : index
    %552 = memref.load %arg5[%c54] : memref<98xf32, #tpu.memory_space<smem>>
    %553 = vector.broadcast %552 : f32 to vector<16x16xf32>
    %554 = arith.mulf %551, %553 : vector<16x16xf32>
    %555 = arith.addf %537, %554 : vector<16x16xf32>
    %556 = vector.extract_strided_slice %550 {offsets = [6, 0], sizes = [16, 16], strides = [1, 1]} : vector<32x16xf32> to vector<16x16xf32>
    %c61 = arith.constant 61 : index
    %557 = memref.load %arg5[%c61] : memref<98xf32, #tpu.memory_space<smem>>
    %558 = vector.broadcast %557 : f32 to vector<16x16xf32>
    %559 = arith.mulf %556, %558 : vector<16x16xf32>
    %560 = arith.addf %542, %559 : vector<16x16xf32>
    %561 = vector.extract_strided_slice %550 {offsets = [7, 0], sizes = [16, 16], strides = [1, 1]} : vector<32x16xf32> to vector<16x16xf32>
    %c68 = arith.constant 68 : index
    %562 = memref.load %arg5[%c68] : memref<98xf32, #tpu.memory_space<smem>>
    %563 = vector.broadcast %562 : f32 to vector<16x16xf32>
    %564 = arith.mulf %561, %563 : vector<16x16xf32>
    %565 = arith.addf %547, %564 : vector<16x16xf32>
    %566 = vector.extract_strided_slice %550 {offsets = [8, 0], sizes = [16, 16], strides = [1, 1]} : vector<32x16xf32> to vector<16x16xf32>
    %c75 = arith.constant 75 : index
    %567 = memref.load %arg5[%c75] : memref<98xf32, #tpu.memory_space<smem>>
    %568 = vector.broadcast %567 : f32 to vector<16x16xf32>
    %569 = arith.mulf %566, %568 : vector<16x16xf32>
    %570 = arith.addf %532, %569 : vector<16x16xf32>
    %571 = vector.extract_strided_slice %550 {offsets = [9, 0], sizes = [16, 16], strides = [1, 1]} : vector<32x16xf32> to vector<16x16xf32>
    %c82 = arith.constant 82 : index
    %572 = memref.load %arg5[%c82] : memref<98xf32, #tpu.memory_space<smem>>
    %573 = vector.broadcast %572 : f32 to vector<16x16xf32>
    %574 = arith.mulf %571, %573 : vector<16x16xf32>
    %575 = arith.addf %555, %574 : vector<16x16xf32>
    %576 = vector.extract_strided_slice %550 {offsets = [10, 0], sizes = [16, 16], strides = [1, 1]} : vector<32x16xf32> to vector<16x16xf32>
    %c89 = arith.constant 89 : index
    %577 = memref.load %arg5[%c89] : memref<98xf32, #tpu.memory_space<smem>>
    %578 = vector.broadcast %577 : f32 to vector<16x16xf32>
    %579 = arith.mulf %576, %578 : vector<16x16xf32>
    %580 = arith.addf %560, %579 : vector<16x16xf32>
    %581 = vector.extract_strided_slice %550 {offsets = [11, 0], sizes = [16, 16], strides = [1, 1]} : vector<32x16xf32> to vector<16x16xf32>
    %c96 = arith.constant 96 : index
    %582 = memref.load %arg5[%c96] : memref<98xf32, #tpu.memory_space<smem>>
    %583 = vector.broadcast %582 : f32 to vector<16x16xf32>
    %584 = arith.mulf %581, %583 : vector<16x16xf32>
    %585 = arith.addf %565, %584 : vector<16x16xf32>
    %c13_i32_76 = arith.constant 13 : i32
    %586 = tpu.dynamic_rotate %80 by %c13_i32_76 dim 1 : vector<32x16xf32>, i32 -> vector<32x16xf32>
    %cst_77 = arith.constant 0.000000e+00 : f32
    %587 = vector.broadcast %cst_77 : f32 to vector<32x16xf32>
    %588 = arith.select %93, %586, %587 : vector<32x16xi1>, vector<32x16xf32>
    %589 = vector.extract_strided_slice %588 {offsets = [5, 0], sizes = [16, 16], strides = [1, 1]} : vector<32x16xf32> to vector<16x16xf32>
    %c55 = arith.constant 55 : index
    %590 = memref.load %arg5[%c55] : memref<98xf32, #tpu.memory_space<smem>>
    %591 = vector.broadcast %590 : f32 to vector<16x16xf32>
    %592 = arith.mulf %589, %591 : vector<16x16xf32>
    %593 = arith.addf %575, %592 : vector<16x16xf32>
    %594 = vector.extract_strided_slice %588 {offsets = [6, 0], sizes = [16, 16], strides = [1, 1]} : vector<32x16xf32> to vector<16x16xf32>
    %c62 = arith.constant 62 : index
    %595 = memref.load %arg5[%c62] : memref<98xf32, #tpu.memory_space<smem>>
    %596 = vector.broadcast %595 : f32 to vector<16x16xf32>
    %597 = arith.mulf %594, %596 : vector<16x16xf32>
    %598 = arith.addf %580, %597 : vector<16x16xf32>
    %599 = vector.extract_strided_slice %588 {offsets = [7, 0], sizes = [16, 16], strides = [1, 1]} : vector<32x16xf32> to vector<16x16xf32>
    %c69 = arith.constant 69 : index
    %600 = memref.load %arg5[%c69] : memref<98xf32, #tpu.memory_space<smem>>
    %601 = vector.broadcast %600 : f32 to vector<16x16xf32>
    %602 = arith.mulf %599, %601 : vector<16x16xf32>
    %603 = arith.addf %585, %602 : vector<16x16xf32>
    %604 = vector.extract_strided_slice %588 {offsets = [8, 0], sizes = [16, 16], strides = [1, 1]} : vector<32x16xf32> to vector<16x16xf32>
    %c76 = arith.constant 76 : index
    %605 = memref.load %arg5[%c76] : memref<98xf32, #tpu.memory_space<smem>>
    %606 = vector.broadcast %605 : f32 to vector<16x16xf32>
    %607 = arith.mulf %604, %606 : vector<16x16xf32>
    %608 = arith.addf %570, %607 : vector<16x16xf32>
    %609 = vector.extract_strided_slice %588 {offsets = [9, 0], sizes = [16, 16], strides = [1, 1]} : vector<32x16xf32> to vector<16x16xf32>
    %c83 = arith.constant 83 : index
    %610 = memref.load %arg5[%c83] : memref<98xf32, #tpu.memory_space<smem>>
    %611 = vector.broadcast %610 : f32 to vector<16x16xf32>
    %612 = arith.mulf %609, %611 : vector<16x16xf32>
    %613 = arith.addf %593, %612 : vector<16x16xf32>
    %614 = vector.extract_strided_slice %588 {offsets = [10, 0], sizes = [16, 16], strides = [1, 1]} : vector<32x16xf32> to vector<16x16xf32>
    %c90 = arith.constant 90 : index
    %615 = memref.load %arg5[%c90] : memref<98xf32, #tpu.memory_space<smem>>
    %616 = vector.broadcast %615 : f32 to vector<16x16xf32>
    %617 = arith.mulf %614, %616 : vector<16x16xf32>
    %618 = arith.addf %598, %617 : vector<16x16xf32>
    %619 = vector.extract_strided_slice %588 {offsets = [11, 0], sizes = [16, 16], strides = [1, 1]} : vector<32x16xf32> to vector<16x16xf32>
    %c97 = arith.constant 97 : index
    %620 = memref.load %arg5[%c97] : memref<98xf32, #tpu.memory_space<smem>>
    %621 = vector.broadcast %620 : f32 to vector<16x16xf32>
    %622 = arith.mulf %619, %621 : vector<16x16xf32>
    %623 = arith.addf %603, %622 : vector<16x16xf32>
    %624 = arith.addf %613, %618 : vector<16x16xf32>
    %625 = arith.addf %623, %608 : vector<16x16xf32>
    %626 = arith.addf %624, %625 : vector<16x16xf32>
    %c0_78 = arith.constant 0 : index
    %627 = memref.load %arg6[%c0_78] : memref<1xf32, #tpu.memory_space<smem>>
    %628 = vector.broadcast %627 : f32 to vector<16x16xf32>
    %629 = arith.addf %626, %628 : vector<16x16xf32>
    %630 = arith.negf %629 : vector<16x16xf32>
    %631 = math.exp %630 : vector<16x16xf32>
    %cst_79 = arith.constant 1.000000e+00 : f32
    %632 = vector.broadcast %cst_79 : f32 to vector<16x16xf32>
    %633 = arith.addf %632, %631 : vector<16x16xf32>
    %634 = arith.divf %632, %633 : vector<16x16xf32>
    %c0_i32_80 = arith.constant 0 : i32
    %c0_81 = arith.constant 0 : index
    %635 = arith.index_cast %c0_i32_80 : i32 to index
    %c0_82 = arith.constant 0 : index
    %c0_83 = arith.constant 0 : index
    %636 = vector.load %arg2[%c0_81, %635, %c0_82, %c0_83] : memref<1x4x16x16xf32, #tpu.memory_space<vmem>>, vector<1x1x16x16xf32>
    %637 = vector.shape_cast %636 : vector<1x1x16x16xf32> to vector<16x16xf32>
    %638 = arith.mulf %637, %634 : vector<16x16xf32>
    %c0_84 = arith.constant 0 : index
    %639 = arith.index_cast %c0_i32_80 : i32 to index
    %c0_85 = arith.constant 0 : index
    %c0_86 = arith.constant 0 : index
    %640 = vector.load %arg7[%c0_84, %639, %c0_85, %c0_86] : memref<1x4x16x16xf32, #tpu.memory_space<vmem>>, vector<1x1x16x16xf32>
    %641 = vector.shape_cast %640 : vector<1x1x16x16xf32> to vector<16x16xf32>
    %642 = vector.shape_cast %638 : vector<16x16xf32> to vector<1x1x16x16xf32>
    tpu.vector_store %arg7[%c0_84, %639, %c0_85, %c0_86], %642 {strides = array<i32>} : memref<1x4x16x16xf32, #tpu.memory_space<vmem>>, vector<1x1x16x16xf32>,
    %c1_i32_87 = arith.constant 1 : i32
    %c0_88 = arith.constant 0 : index
    %643 = arith.index_cast %c1_i32_87 : i32 to index
    %c0_89 = arith.constant 0 : index
    %c0_90 = arith.constant 0 : index
    %644 = vector.load %arg2[%c0_88, %643, %c0_89, %c0_90] : memref<1x4x16x16xf32, #tpu.memory_space<vmem>>, vector<1x1x16x16xf32>
    %645 = vector.shape_cast %644 : vector<1x1x16x16xf32> to vector<16x16xf32>
    %646 = arith.mulf %645, %634 : vector<16x16xf32>
    %c0_91 = arith.constant 0 : index
    %647 = arith.index_cast %c1_i32_87 : i32 to index
    %c0_92 = arith.constant 0 : index
    %c0_93 = arith.constant 0 : index
    %648 = vector.load %arg7[%c0_91, %647, %c0_92, %c0_93] : memref<1x4x16x16xf32, #tpu.memory_space<vmem>>, vector<1x1x16x16xf32>
    %649 = vector.shape_cast %648 : vector<1x1x16x16xf32> to vector<16x16xf32>
    %650 = vector.shape_cast %646 : vector<16x16xf32> to vector<1x1x16x16xf32>
    tpu.vector_store %arg7[%c0_91, %647, %c0_92, %c0_93], %650 {strides = array<i32>} : memref<1x4x16x16xf32, #tpu.memory_space<vmem>>, vector<1x1x16x16xf32>,
    %c2_i32_94 = arith.constant 2 : i32
    %c0_95 = arith.constant 0 : index
    %651 = arith.index_cast %c2_i32_94 : i32 to index
    %c0_96 = arith.constant 0 : index
    %c0_97 = arith.constant 0 : index
    %652 = vector.load %arg2[%c0_95, %651, %c0_96, %c0_97] : memref<1x4x16x16xf32, #tpu.memory_space<vmem>>, vector<1x1x16x16xf32>
    %653 = vector.shape_cast %652 : vector<1x1x16x16xf32> to vector<16x16xf32>
    %654 = arith.mulf %653, %634 : vector<16x16xf32>
    %c0_98 = arith.constant 0 : index
    %655 = arith.index_cast %c2_i32_94 : i32 to index
    %c0_99 = arith.constant 0 : index
    %c0_100 = arith.constant 0 : index
    %656 = vector.load %arg7[%c0_98, %655, %c0_99, %c0_100] : memref<1x4x16x16xf32, #tpu.memory_space<vmem>>, vector<1x1x16x16xf32>
    %657 = vector.shape_cast %656 : vector<1x1x16x16xf32> to vector<16x16xf32>
    %658 = vector.shape_cast %654 : vector<16x16xf32> to vector<1x1x16x16xf32>
    tpu.vector_store %arg7[%c0_98, %655, %c0_99, %c0_100], %658 {strides = array<i32>} : memref<1x4x16x16xf32, #tpu.memory_space<vmem>>, vector<1x1x16x16xf32>,
    %c3_i32_101 = arith.constant 3 : i32
    %c0_102 = arith.constant 0 : index
    %659 = arith.index_cast %c3_i32_101 : i32 to index
    %c0_103 = arith.constant 0 : index
    %c0_104 = arith.constant 0 : index
    %660 = vector.load %arg2[%c0_102, %659, %c0_103, %c0_104] : memref<1x4x16x16xf32, #tpu.memory_space<vmem>>, vector<1x1x16x16xf32>
    %661 = vector.shape_cast %660 : vector<1x1x16x16xf32> to vector<16x16xf32>
    %662 = arith.mulf %661, %634 : vector<16x16xf32>
    %c0_105 = arith.constant 0 : index
    %663 = arith.index_cast %c3_i32_101 : i32 to index
    %c0_106 = arith.constant 0 : index
    %c0_107 = arith.constant 0 : index
    %664 = vector.load %arg7[%c0_105, %663, %c0_106, %c0_107] : memref<1x4x16x16xf32, #tpu.memory_space<vmem>>, vector<1x1x16x16xf32>
    %665 = vector.shape_cast %664 : vector<1x1x16x16xf32> to vector<16x16xf32>
    %666 = vector.shape_cast %662 : vector<16x16xf32> to vector<1x1x16x16xf32>
    tpu.vector_store %arg7[%c0_105, %663, %c0_106, %c0_107], %666 {strides = array<i32>} : memref<1x4x16x16xf32, #tpu.memory_space<vmem>>, vector<1x1x16x16xf32>,
    %c4_i32_108 = arith.constant 4 : i32
    return
  }
  func.func @transform_0(%arg0: i32, %arg1: i32) -> (i32, i32, i32, i32) {
    %c0_i32 = arith.constant 0 : i32
    %c0_i32_0 = arith.constant 0 : i32
    %c0_i32_1 = arith.constant 0 : i32
    return %arg0, %c0_i32, %arg1, %c0_i32_0 : i32, i32, i32, i32
  }
  func.func @transform_1(%arg0: i32, %arg1: i32) -> (i32, i32, i32, i32) {
    %c2_i32 = arith.constant 2 : i32
    %0 = arith.muli %arg1, %c2_i32 : i32
    %c1_i32 = arith.constant 1 : i32
    %1 = arith.subi %0, %c1_i32 : i32
    %c0_i32 = arith.constant 0 : i32
    %2 = arith.maxsi %1, %c0_i32 : i32
    %c0_i32_0 = arith.constant 0 : i32
    %c0_i32_1 = arith.constant 0 : i32
    %c0_i32_2 = arith.constant 0 : i32
    return %arg0, %c0_i32_0, %2, %c0_i32_1 : i32, i32, i32, i32
  }
  func.func @transform_2(%arg0: i32, %arg1: i32) -> (i32, i32, i32, i32) {
    %c1_i32 = arith.constant 1 : i32
    %0 = arith.addi %arg1, %c1_i32 : i32
    %c2_i32 = arith.constant 2 : i32
    %1 = arith.muli %0, %c2_i32 : i32
    %c1_i32_0 = arith.constant 1 : i32
    %2 = arith.minsi %1, %c1_i32_0 : i32
    %c0_i32 = arith.constant 0 : i32
    %c0_i32_1 = arith.constant 0 : i32
    %c0_i32_2 = arith.constant 0 : i32
    return %arg0, %c0_i32, %2, %c0_i32_1 : i32, i32, i32, i32
  }
  func.func @transform_3(%arg0: i32, %arg1: i32) -> i32 {
    %c0_i32 = arith.constant 0 : i32
    %c0_i32_0 = arith.constant 0 : i32
    return %c0_i32 : i32
  }
  func.func @transform_4(%arg0: i32, %arg1: i32) -> i32 {
    %c0_i32 = arith.constant 0 : i32
    %c0_i32_0 = arith.constant 0 : i32
    return %c0_i32 : i32
  }
  func.func @transform_5(%arg0: i32, %arg1: i32) -> (i32, i32, i32, i32) {
    %c0_i32 = arith.constant 0 : i32
    %c0_i32_0 = arith.constant 0 : i32
    %c0_i32_1 = arith.constant 0 : i32
    return %arg0, %c0_i32, %arg1, %c0_i32_0 : i32, i32, i32, i32
  }
}

</mosaic_0001>

<llo_original>
// kernel: tpu_custom_call.1
$region0: #{tpu_custom_call.1}
  #allocation0 [shape = 'u32[]', space=smem, size = 0x4, offset = 0x4, fixed_abs, tag = 'smem constant byte address 0x4 - core index']
  #allocation1 [shape = 'u32[144,128]{1,0:T(1,128)}', space=vmem, size = 0x12000, scoped, tag = 'internal scratch']
  #allocation2 [shape = 'f32[1]{0:T(128)S(6)}', space=smem, size = 0x200, scoped, tag = 'scoped memory for tpu_custom_call.1']
  %s0 = inlined_call_operand.hbm [shape: f32[2,4,16,16], index: 0, kind: input, shape index: {}]
  %s1 = inlined_call_operand.hbm [shape: f32[2,4,16,16], index: 1, kind: input, shape index: {}]
  %s2 = inlined_call_operand.hbm [shape: f32[2,4,16,16], index: 2, kind: input, shape index: {}]
  %s3 = inlined_call_operand.vmem [shape: f32[98], index: 3, kind: input, shape index: {}]
  %s4 = inlined_call_operand.<no memory space> [shape: f32[1], index: 4, kind: input, shape index: {}]
  %s5 = inlined_call_operand.hbm [shape: f32[2,4,16,16], index: 5, kind: output, shape index: {}]
  %s6 = sld [smem:[#allocation0]]
  $region69: #{tpu_custom_call.1} parent=0
    _
  %s8 = ssub.s32 1, %s6
  %s9 = scalar_select 0, %s8, %s6
  %10 = sst [smem:[#allocation2]] %s4
  $region1: #{tpu_custom_call.1} parent=0
    #allocation3 [shape = 'u8[65536]{0}', space=vmem, size = 0x10000, scoped, tag = 'input window, operand 0']
    #allocation4 [shape = 's32[2]{0}', space=sflag, size = 0x8, scoped, tag = 'scoped memory for tpu_custom_call.1']
    #allocation5 [shape = 's32[2]{0}', space=sflag, size = 0x8, scoped, tag = 'scoped memory for tpu_custom_call.1']
    #allocation6 [shape = 's32[2]{0}', space=sflag, size = 0x8, scoped, tag = 'scoped memory for tpu_custom_call.1']
    #allocation7 [shape = 'u8[32768]{0}', space=vmem, size = 0x8000, scoped, tag = 'input window, operand 1']
    #allocation8 [shape = 's32[2]{0}', space=sflag, size = 0x8, scoped, tag = 'scoped memory for tpu_custom_call.1']
    #allocation9 [shape = 'u8[32768]{0}', space=vmem, size = 0x8000, scoped, tag = 'input window, operand 2']
    #allocation10 [shape = 'u8[512]{0}', space=smem, size = 0x200, scoped, tag = 'input window, operand 3, single buffered']
    #allocation11 [shape = 'u8[65536]{0}', space=vmem, size = 0x10000, scoped, tag = 'output window, operand 0']
    %11 = vsyncpa [#allocation4], 0
    %s12 = scalar_lea.sflag [#allocation4], 1
    %13 = vsyncpa %s12, 0
    %14 = vsyncpa [#allocation8], 0
    %s15 = scalar_lea.sflag [#allocation8], 1
    %16 = vsyncpa %s15, 0
    %17 = vsyncpa [#allocation6], 0
    %18 = vsyncpa [#allocation5], 0
    %s19 = scalar_lea.sflag [#allocation5], 1
    %20 = vsyncpa %s19, 0
    loop: start=0, step=1, limit=4
    $region2: #{tpu_custom_call.1} parent=1 // loop_pre_header
      _
    $region3: #{tpu_custom_call.1} parent=1 // loop_header
      %s22 = sphi 0, %s26
      %p23 = scmp.ge.s32.totalorder %s22, 4
      %s29 = sphi 0, %s41
      %s30 = sphi 0, %s37
      %s31 = sphi 0, %s29
      %s32 = sphi 0, %s30
      %s33 = sphi 0, %s31
      %s34 = sphi 0, %s32
      %s46 = sphi 0, %s48
      %s49 = sphi 0, %s46
      %s50 = sphi 0, %s49
      %s66 = sphi 0, %s50
      %s82 = sphi 0, %s84
      %s85 = sphi 0, %s82
      %s86 = sphi 0, %s85
      %s102 = sphi 0, %s86
      %s118 = sphi 0, %s120
      %s121 = sphi 0, %s118
      %s122 = sphi 0, %s121
      %s138 = sphi 0, %s122
      %s142 = sphi 0, %s142
      %s144 = sphi 0, %s142
      %s145 = sphi 0, %s144
      %s159 = sphi 0, %s145
      %s163 = sphi 0, %s163
      %s165 = sphi 0, %s163
      %s166 = sphi 0, %s165
      %s180 = sphi 0, %s166
      %s188 = sphi 0, %s190
      %s191 = sphi 0, %s188
      %s192 = sphi 0, %s191
      %s208 = sphi 0, %s192
    $region4: #{tpu_custom_call.1} parent=1 // loop_header_branch
      %25 = sbr.rel (%p23) target = $region8
    $region5: #{tpu_custom_call.1} parent=1 // loop_body
      %s27 = ssub.s32 %s22, 1
      %s28 = ssub.s32 %s22, 2
      %s35 = sadd.s32 1, %s30
      %p36 = scmp.ge.s32.totalorder %s35, 1
      %s37 = scalar_select %p36, 0, %s35
      %s38 = sadd.s32 1, %s29
      %s39 = scalar_select %p36, %s38, %s29
      %p40 = scmp.ge.s32.totalorder %s39, 2
      %s41 = scalar_select %p40, 0, %s39
      %s42 = ssub.s32 %s29, %s41
      %s43 = ssub.s32 %s30, %s37
      %s44 = sor.u32 %s42, %s43
      %p45 = scmp.eq.s32.totalorder %s44, 0
      %s47 = sadd.s32 %s46, 1
      %s48 = scalar_select %p45, %s46, %s47
      %p51 = pneg %p45
      %p52 = scmp.eq.s32.totalorder %s22, 1
      %p53 = por %p51, %p52
      %p54 = scmp.ne.s32.totalorder %s46, %s49
      %p55 = scmp.eq.s32.totalorder %s22, 0
      %p56 = por %p54, %p55
      %p57 = scmp.ne.s32.totalorder %s46, %s49
      %p58 = scmp.eq.s32.totalorder %s27, 1
      %p59 = por %p57, %p58
      %p60 = scmp.ne.s32.totalorder %s49, %s50
      %p61 = scmp.eq.s32.totalorder %s27, 0
      %p62 = por %p60, %p61
      %p63 = scmp.ne.s32.totalorder %s49, %s50
      %p64 = scmp.eq.s32.totalorder %s28, 1
      %p65 = por %p63, %p64
      %p67 = scmp.ne.s32.totalorder %s50, %s66
      %p68 = scmp.eq.s32.totalorder %s28, 0
      %p69 = por %p67, %p68
      %s70 = smul.u32 %s30, 2
      %s71 = ssub.s32 %s70, 1
      %p72 = scmp.gt.s32.totalorder %s71, 0
      %s73 = scalar_select %p72, %s71, 0
      %s74 = smul.u32 %s37, 2
      %s75 = ssub.s32 %s74, 1
      %p76 = scmp.gt.s32.totalorder %s75, 0
      %s77 = scalar_select %p76, %s75, 0
      %s78 = ssub.s32 %s29, %s41
      %s79 = ssub.s32 %s73, %s77
      %s80 = sor.u32 %s78, %s79
      %p81 = scmp.eq.s32.totalorder %s80, 0
      %s83 = sadd.s32 %s82, 1
      %s84 = scalar_select %p81, %s82, %s83
      %p87 = pneg %p81
      %p88 = scmp.eq.s32.totalorder %s22, 1
      %p89 = por %p87, %p88
      %p90 = scmp.ne.s32.totalorder %s82, %s85
      %p91 = scmp.eq.s32.totalorder %s22, 0
      %p92 = por %p90, %p91
      %p93 = scmp.ne.s32.totalorder %s82, %s85
      %p94 = scmp.eq.s32.totalorder %s27, 1
      %p95 = por %p93, %p94
      %p96 = scmp.ne.s32.totalorder %s85, %s86
      %p97 = scmp.eq.s32.totalorder %s27, 0
      %p98 = por %p96, %p97
      %p99 = scmp.ne.s32.totalorder %s85, %s86
      %p100 = scmp.eq.s32.totalorder %s28, 1
      %p101 = por %p99, %p100
      %p103 = scmp.ne.s32.totalorder %s86, %s102
      %p104 = scmp.eq.s32.totalorder %s28, 0
      %p105 = por %p103, %p104
      %s106 = sadd.s32 %s30, 1
      %s107 = smul.u32 %s106, 2
      %p108 = scmp.lt.s32.totalorder %s107, 1
      %s109 = scalar_select %p108, %s107, 1
      %s110 = sadd.s32 %s37, 1
      %s111 = smul.u32 %s110, 2
      %p112 = scmp.lt.s32.totalorder %s111, 1
      %s113 = scalar_select %p112, %s111, 1
      %s114 = ssub.s32 %s29, %s41
      %s115 = ssub.s32 %s109, %s113
      %s116 = sor.u32 %s114, %s115
      %p117 = scmp.eq.s32.totalorder %s116, 0
      %s119 = sadd.s32 %s118, 1
      %s120 = scalar_select %p117, %s118, %s119
      %p123 = pneg %p117
      %p124 = scmp.eq.s32.totalorder %s22, 1
      %p125 = por %p123, %p124
      %p126 = scmp.ne.s32.totalorder %s118, %s121
      %p127 = scmp.eq.s32.totalorder %s22, 0
      %p128 = por %p126, %p127
      %p129 = scmp.ne.s32.totalorder %s118, %s121
      %p130 = scmp.eq.s32.totalorder %s27, 1
      %p131 = por %p129, %p130
      %p132 = scmp.ne.s32.totalorder %s121, %s122
      %p133 = scmp.eq.s32.totalorder %s27, 0
      %p134 = por %p132, %p133
      %p135 = scmp.ne.s32.totalorder %s121, %s122
      %p136 = scmp.eq.s32.totalorder %s28, 1
      %p137 = por %p135, %p136
      %p139 = scmp.ne.s32.totalorder %s122, %s138
      %p140 = scmp.eq.s32.totalorder %s28, 0
      %p141 = por %p139, %p140
      %s143 = sadd.s32 %s142, 1
      %p146 = scmp.eq.s32.totalorder %s22, 1
      %p147 = scmp.ne.s32.totalorder %s142, %s144
      %p148 = scmp.eq.s32.totalorder %s22, 0
      %p149 = por %p147, %p148
      %p150 = scmp.ne.s32.totalorder %s142, %s144
      %p151 = scmp.eq.s32.totalorder %s27, 1
      %p152 = por %p150, %p151
      %p153 = scmp.ne.s32.totalorder %s144, %s145
      %p154 = scmp.eq.s32.totalorder %s27, 0
      %p155 = por %p153, %p154
      %p156 = scmp.ne.s32.totalorder %s144, %s145
      %p157 = scmp.eq.s32.totalorder %s28, 1
      %p158 = por %p156, %p157
      %p160 = scmp.ne.s32.totalorder %s145, %s159
      %p161 = scmp.eq.s32.totalorder %s28, 0
      %p162 = por %p160, %p161
      %s164 = sadd.s32 %s163, 1
      %p167 = scmp.eq.s32.totalorder %s22, 1
      %p168 = scmp.ne.s32.totalorder %s163, %s165
      %p169 = scmp.eq.s32.totalorder %s22, 0
      %p170 = por %p168, %p169
      %p171 = scmp.ne.s32.totalorder %s163, %s165
      %p172 = scmp.eq.s32.totalorder %s27, 1
      %p173 = por %p171, %p172
      %p174 = scmp.ne.s32.totalorder %s165, %s166
      %p175 = scmp.eq.s32.totalorder %s27, 0
      %p176 = por %p174, %p175
      %p177 = scmp.ne.s32.totalorder %s165, %s166
      %p178 = scmp.eq.s32.totalorder %s28, 1
      %p179 = por %p177, %p178
      %p181 = scmp.ne.s32.totalorder %s166, %s180
      %p182 = scmp.eq.s32.totalorder %s28, 0
      %p183 = por %p181, %p182
      %s184 = ssub.s32 %s29, %s41
      %s185 = ssub.s32 %s30, %s37
      %s186 = sor.u32 %s184, %s185
      %p187 = scmp.eq.s32.totalorder %s186, 0
      %s189 = sadd.s32 %s188, 1
      %s190 = scalar_select %p187, %s188, %s189
      %p193 = pneg %p187
      %p194 = scmp.eq.s32.totalorder %s22, 1
      %p195 = por %p193, %p194
      %p196 = scmp.ne.s32.totalorder %s188, %s191
      %p197 = scmp.eq.s32.totalorder %s22, 0
      %p198 = por %p196, %p197
      %p199 = scmp.ne.s32.totalorder %s188, %s191
      %p200 = scmp.eq.s32.totalorder %s27, 1
      %p201 = por %p199, %p200
      %p202 = scmp.ne.s32.totalorder %s191, %s192
      %p203 = scmp.eq.s32.totalorder %s27, 0
      %p204 = por %p202, %p203
      %p205 = scmp.ne.s32.totalorder %s191, %s192
      %p206 = scmp.eq.s32.totalorder %s28, 1
      %p207 = por %p205, %p206
      %p209 = scmp.ne.s32.totalorder %s192, %s208
      %p210 = scmp.eq.s32.totalorder %s28, 0
      %p211 = por %p209, %p210
      %p212 = scmp.le.s32.totalorder 1, %s22
      %p213 = scmp.lt.s32.totalorder %s22, 3
      %p214 = pnand %p212, %p213
      %p215 = pneg %p214
      // Predicated region
      $region9: #{tpu_custom_call.1} parent=5 // pred_check
        _
      $region10: #{tpu_custom_call.1} parent=5 // pred_check_branch
        %217 = sbr.rel (%p214) target = $region12
      $region11: #{tpu_custom_call.1} parent=5 // pred_region
        %s218 = ssub.s32 %s22, 1
        // Predicated region
        $region13: #{tpu_custom_call.1} parent=11 // pred_check
          %p219 = pneg %p155
        $region14: #{tpu_custom_call.1} parent=11 // pred_check_branch
          %221 = sbr.rel (%p219) target = $region16
        $region15: #{tpu_custom_call.1} parent=11 // pred_region
          %s223 = ssub.s32 16, 16
          %224 = vsyncadd [#allocation6], %s223
          %s226 = sshll.u32 %s3, 4
          %s227 = int_to_ptr.vmem [resolvable:$true] %s226
          %229 = dma.vmem_to_smem %s227, 16, [#allocation10], [#allocation6]
        $region16: #{tpu_custom_call.1} parent=11 // pred_fallthru
          _
        // Predicated region
        $region17: #{tpu_custom_call.1} parent=11 // pred_check
          %p230 = pneg %p176
        $region18: #{tpu_custom_call.1} parent=11 // pred_check_branch
          %232 = sbr.rel (%p230) target = $region20
        $region19: #{tpu_custom_call.1} parent=11 // pred_region
          _
        $region20: #{tpu_custom_call.1} parent=11 // pred_fallthru
          _
      $region12: #{tpu_custom_call.1} parent=5 // pred_fallthru
        _
      %p233 = scmp.lt.s32.totalorder %s22, 2
      // Predicated region
      $region21: #{tpu_custom_call.1} parent=5 // pred_check
        %p234 = pneg %p233
      $region22: #{tpu_custom_call.1} parent=5 // pred_check_branch
        %236 = sbr.rel (%p234) target = $region24
      $region23: #{tpu_custom_call.1} parent=5 // pred_region
        // Predicated region
        $region25: #{tpu_custom_call.1} parent=23 // pred_check
          %p237 = pneg %p56
        $region26: #{tpu_custom_call.1} parent=23 // pred_check_branch
          %239 = sbr.rel (%p237) target = $region28
        $region27: #{tpu_custom_call.1} parent=23 // pred_region
          %s240 = sand.u32 %s46, 1
          %s241 = scalar_lea.sflag [#allocation4], %s240
          %s242 = sand.u32 %s46, 1
          %s243 = smul.addr %s242, 64
          %s244 = scalar_lea.vmem [#allocation3], %s243
          %s245 = smul.u32 2, %s30
          %s247 = ssub.s32 1024, 1024
          %248 = vsyncadd %s241, %s247
          %s249 = smul.addr %s29, 8
          %s250 = sadd.s32 %s245, %s249
          %s251 = smul.addr %s250, 128
          %s252 = scalar_lea.hbm %s0, %s251
          %s253 = sshll.u32 %s244, 4
          %s254 = int_to_ptr.vmem [resolvable:$true] %s253
          %259 = dma.hbm_to_vmem [thread:$0]  %s252, 1024, %s254, %s241, 128, 128, 8
        $region28: #{tpu_custom_call.1} parent=23 // pred_fallthru
          _
        // Predicated region
        $region29: #{tpu_custom_call.1} parent=23 // pred_check
          %p260 = pneg %p92
        $region30: #{tpu_custom_call.1} parent=23 // pred_check_branch
          %262 = sbr.rel (%p260) target = $region32
        $region31: #{tpu_custom_call.1} parent=23 // pred_region
          %s263 = sand.u32 %s22, 1
          %s264 = scalar_lea.sflag [#allocation8], %s263
          %s265 = sand.u32 %s82, 1
          %s266 = smul.addr %s265, 32
          %s267 = scalar_lea.vmem [#allocation7], %s266
          %s268 = smul.u32 %s30, 2
          %s269 = ssub.s32 %s268, 1
          %p270 = scmp.gt.s32.totalorder %s269, 0
          %s271 = scalar_select %p270, %s269, 0
          %s273 = ssub.s32 512, 512
          %274 = vsyncadd %s264, %s273
          %s275 = smul.addr %s29, 8
          %s276 = sadd.s32 %s271, %s275
          %s277 = smul.addr %s276, 128
          %s278 = scalar_lea.hbm %s1, %s277
          %s279 = sshll.u32 %s267, 4
          %s280 = int_to_ptr.vmem [resolvable:$true] %s279
          %285 = dma.hbm_to_vmem [thread:$0]  %s278, 512, %s280, %s264, 256, 128, 8
        $region32: #{tpu_custom_call.1} parent=23 // pred_fallthru
          _
        // Predicated region
        $region33: #{tpu_custom_call.1} parent=23 // pred_check
          %p286 = pneg %p128
        $region34: #{tpu_custom_call.1} parent=23 // pred_check_branch
          %288 = sbr.rel (%p286) target = $region36
        $region35: #{tpu_custom_call.1} parent=23 // pred_region
          %s289 = sand.u32 %s22, 1
          %s290 = scalar_lea.sflag [#allocation8], %s289
          %s291 = sand.u32 %s118, 1
          %s292 = smul.addr %s291, 32
          %s293 = scalar_lea.vmem [#allocation9], %s292
          %s294 = sadd.s32 %s30, 1
          %s295 = smul.u32 %s294, 2
          %p296 = scmp.lt.s32.totalorder %s295, 1
          %s297 = scalar_select %p296, %s295, 1
          %s299 = ssub.s32 512, 512
          %300 = vsyncadd %s290, %s299
          %s301 = smul.addr %s29, 8
          %s302 = sadd.s32 %s297, %s301
          %s303 = smul.addr %s302, 128
          %s304 = scalar_lea.hbm %s2, %s303
          %s305 = sshll.u32 %s293, 4
          %s306 = int_to_ptr.vmem [resolvable:$true] %s305
          %311 = dma.hbm_to_vmem [thread:$0]  %s304, 512, %s306, %s290, 256, 128, 8
        $region36: #{tpu_custom_call.1} parent=23 // pred_fallthru
          _
      $region24: #{tpu_custom_call.1} parent=5 // pred_fallthru
        _
      %p312 = scmp.le.s32.totalorder 1, %s22
      %p313 = scmp.lt.s32.totalorder %s22, 3
      %p314 = pnand %p312, %p313
      %p315 = pneg %p314
      // Predicated region
      $region37: #{tpu_custom_call.1} parent=5 // pred_check
        _
      $region38: #{tpu_custom_call.1} parent=5 // pred_check_branch
        %317 = sbr.rel (%p314) target = $region40
      $region39: #{tpu_custom_call.1} parent=5 // pred_region
        %s318 = ssub.s32 %s22, 1
        %s319 = sand.u32 %s49, 1
        %s320 = scalar_lea.sflag [#allocation4], %s319
        %s321 = sand.u32 %s49, 1
        %s322 = smul.addr %s321, 64
        %s323 = scalar_lea.vmem [#allocation3], %s322
        // Predicated region
        $region41: #{tpu_custom_call.1} parent=39 // pred_check
          %p324 = pneg %p62
        $region42: #{tpu_custom_call.1} parent=39 // pred_check_branch
          %326 = sbr.rel (%p324) target = $region44
        $region43: #{tpu_custom_call.1} parent=39 // pred_region
          %327 = dma.done %s320, 1024
        $region44: #{tpu_custom_call.1} parent=39 // pred_fallthru
          _
        %s328 = sand.u32 %s27, 1
        %s329 = scalar_lea.sflag [#allocation8], %s328
        %s330 = sand.u32 %s85, 1
        %s331 = smul.addr %s330, 32
        %s332 = scalar_lea.vmem [#allocation7], %s331
        // Predicated region
        $region45: #{tpu_custom_call.1} parent=39 // pred_check
          %p333 = pneg %p98
        $region46: #{tpu_custom_call.1} parent=39 // pred_check_branch
          %335 = sbr.rel (%p333) target = $region48
        $region47: #{tpu_custom_call.1} parent=39 // pred_region
          %336 = dma.done %s329, 512
        $region48: #{tpu_custom_call.1} parent=39 // pred_fallthru
          _
        %s337 = sand.u32 %s27, 1
        %s338 = scalar_lea.sflag [#allocation8], %s337
        %s339 = sand.u32 %s121, 1
        %s340 = smul.addr %s339, 32
        %s341 = scalar_lea.vmem [#allocation9], %s340
        // Predicated region
        $region49: #{tpu_custom_call.1} parent=39 // pred_check
          %p342 = pneg %p134
        $region50: #{tpu_custom_call.1} parent=39 // pred_check_branch
          %344 = sbr.rel (%p342) target = $region52
        $region51: #{tpu_custom_call.1} parent=39 // pred_region
          %345 = dma.done %s338, 512
        $region52: #{tpu_custom_call.1} parent=39 // pred_fallthru
          _
        // Predicated region
        $region53: #{tpu_custom_call.1} parent=39 // pred_check
          %p346 = pneg %p155
        $region54: #{tpu_custom_call.1} parent=39 // pred_check_branch
          %348 = sbr.rel (%p346) target = $region56
        $region55: #{tpu_custom_call.1} parent=39 // pred_region
          %349 = dma.done [#allocation6], 16
        $region56: #{tpu_custom_call.1} parent=39 // pred_fallthru
          _
        %350 = sfence
        %s351 = sand.u32 %s49, 1
        %s352 = scalar_lea.sflag [#allocation4], %s351
        %s353 = sand.u32 %s49, 1
        %s354 = smul.addr %s353, 64
        %s355 = scalar_lea.vmem [#allocation3], %s354
        %p356 = pneg %p62
        %p357 = pneg %p59
        %s358 = sand.u32 %s27, 1
        %s359 = scalar_lea.sflag [#allocation8], %s358
        %s360 = sand.u32 %s85, 1
        %s361 = smul.addr %s360, 32
        %s362 = scalar_lea.vmem [#allocation7], %s361
        %p363 = pneg %p98
        %p364 = pneg %p95
        %s365 = sand.u32 %s27, 1
        %s366 = scalar_lea.sflag [#allocation8], %s365
        %s367 = sand.u32 %s121, 1
        %s368 = smul.addr %s367, 32
        %s369 = scalar_lea.vmem [#allocation9], %s368
        %p370 = pneg %p134
        %p371 = pneg %p131
        %p372 = pneg %p155
        %p373 = pneg %p152
        %p374 = pneg %p176
        %p375 = pneg %p173
        %p376 = pneg %p204
        %p377 = pneg %p201
        %s378 = sand.u32 %s191, 1
        %s379 = scalar_lea.sflag [#allocation5], %s378
        %s380 = sand.u32 %s191, 1
        %s381 = smul.addr %s380, 64
        %s382 = scalar_lea.vmem [#allocation11], %s381
        %s383 = smul.u32 2, %s32
        %s384 = smul.u32 %s32, 2
        %s385 = ssub.s32 %s384, 1
        %p386 = scmp.gt.s32.totalorder %s385, 0
        %s387 = scalar_select %p386, %s385, 0
        %s388 = sadd.s32 %s32, 1
        %s389 = smul.u32 %s388, 2
        %p390 = scmp.lt.s32.totalorder %s389, 1
        %s391 = scalar_select %p390, %s389, 1
        %s392 = smul.u32 2, %s32
        %v393 = vld [vmem:[%s323] sm:$0xff]
        %v394 = vld [vmem:[%s323 + $0x8] sm:$0xff]
        %v395 = vld [vmem:[%s332] sm:$0xff]
        %v396 = vld [vmem:[%s341] sm:$0xff]
        %v397 = vadd.f32 %v393, 0.0
        %v398 = vadd.f32 %v394, 0.0
        %v399 = vadd.f32 %v395, 0.0
        %v400 = vadd.f32 %v396, 0.0
        %s401 = scalar_lea.vmem %s323, 16 [#allocation3]
        %v402 = vld [vmem:[%s401] sm:$0xff]
        %v403 = vld [vmem:[%s401 + $0x8] sm:$0xff]
        %s404 = scalar_lea.vmem %s332, 8 [#allocation7]
        %v405 = vld [vmem:[%s404] sm:$0xff]
        %s406 = scalar_lea.vmem %s341, 8 [#allocation9]
        %v407 = vld [vmem:[%s406] sm:$0xff]
        %v408 = vadd.f32 %v397, %v402
        %v409 = vadd.f32 %v398, %v403
        %v410 = vmax.f32 %v393, %v402
        %v411 = vmax.f32 %v394, %v403
        %v412 = vadd.f32 %v399, %v405
        %v413 = vmax.f32 %v395, %v405
        %v414 = vadd.f32 %v400, %v407
        %v415 = vmax.f32 %v396, %v407
        %s416 = scalar_lea.vmem %s323, 32 [#allocation3]
        %v417 = vld [vmem:[%s416] sm:$0xff]
        %v418 = vld [vmem:[%s416 + $0x8] sm:$0xff]
        %s419 = scalar_lea.vmem %s332, 16 [#allocation7]
        %v420 = vld [vmem:[%s419] sm:$0xff]
        %s421 = scalar_lea.vmem %s341, 16 [#allocation9]
        %v422 = vld [vmem:[%s421] sm:$0xff]
        %v423 = vadd.f32 %v408, %v417
        %v424 = vadd.f32 %v409, %v418
        %v425 = vmax.f32 %v410, %v417
        %v426 = vmax.f32 %v411, %v418
        %v427 = vadd.f32 %v412, %v420
        %v428 = vmax.f32 %v413, %v420
        %v429 = vadd.f32 %v414, %v422
        %v430 = vmax.f32 %v415, %v422
        %s431 = scalar_lea.vmem %s323, 48 [#allocation3]
        %v432 = vld [vmem:[%s431] sm:$0xff]
        %v433 = vld [vmem:[%s431 + $0x8] sm:$0xff]
        %s434 = scalar_lea.vmem %s332, 24 [#allocation7]
        %v435 = vld [vmem:[%s434] sm:$0xff]
        %s436 = scalar_lea.vmem %s341, 24 [#allocation9]
        %v437 = vld [vmem:[%s436] sm:$0xff]
        %v438 = vadd.f32 %v423, %v432
        %v439 = vadd.f32 %v424, %v433
        %v440 = vmax.f32 %v425, %v432
        %v441 = vmax.f32 %v426, %v433
        %v442 = vadd.f32 %v427, %v435
        %v443 = vmax.f32 %v428, %v435
        %v444 = vadd.f32 %v429, %v437
        %v445 = vmax.f32 %v430, %v437
        %p446 = scmp.gt.s32.totalorder %s32, 0
        %p447 = scmp.lt.s32.totalorder %s32, 0
        %v448 = vmul.f32 %v442, 0.25
        %s449 = scalar_select %p446, 1, 0
        %v450 = vstv %s449
        %vm451 = vcmp.eq.s32.totalorder %v450, 1
        %v452 = vsel %vm451, %v448, 0.0
        %v453 = vmul.f32 %v438, 0.25
        %v454 = vmul.f32 %v439, 0.25
        %v455 = vmul.f32 %v444, 0.25
        %s456 = scalar_select %p447, 1, 0
        %v457 = vstv %s456
        %vm458 = vcmp.eq.s32.totalorder %v457, 1
        %v459 = vsel %vm458, %v455, 0.0
        %v460 = vsel %vm451, %v443, 0.0
        %v461 = vsel %vm458, %v445, 0.0
        %v462 = vlaneseq
        %v463 = vand.u32 %v462, 127
        %vm464 = vcmp.ge.s32.totalorder %v463, 3
        %vm465 = vcmp.ge.s32.totalorder %v463, 2
        %vm466 = vcmp.ge.s32.totalorder %v463, 1
        %vm467 = vcmp.lt.s32.totalorder %v463, 15
        %vm468 = vcmp.lt.s32.totalorder %v463, 14
        %vm469 = vcmp.lt.s32.totalorder %v463, 13
        %vm470 = vcmask 1047680
        %471 = vrot.lane.b32.xlu0 %v452, 16
        %v472 = vpop.permute.xlu0 %471
        %v473 = vsel %vm470, %v472, %v452
        %474 = vrot.lane.b32.xlu0 %v453, 16
        %v475 = vpop.permute.xlu0 %474
        %v476 = vsel %vm470, %v475, %v453
        %477 = vrot.lane.b32.xlu0 %v454, 16
        %v478 = vpop.permute.xlu0 %477
        %v479 = vsel %vm470, %v478, %v454
        %480 = vrot.lane.b32.xlu0 %v459, 16
        %v481 = vpop.permute.xlu0 %480
        %v482 = vsel %vm470, %v481, %v459
        %483 = vrot.lane.b32.xlu0 %v473, 16
        %v484 = vpop.permute.xlu0 %483
        %485 = vrot.lane.b32.xlu0 %v476, 16
        %v486 = vpop.permute.xlu0 %485
        %487 = vrot.lane.b32.xlu0 %v479, 16
        %v488 = vpop.permute.xlu0 %487
        %489 = vrot.lane.b32.xlu0 %v482, 16
        %v490 = vpop.permute.xlu0 %489
        %v491 = vsel %vm470, %v484, %v452
        %v492 = vsel %vm470, %v486, %v453
        %v493 = vsel %vm470, %v488, %v454
        %v494 = vsel %vm470, %v490, %v459
        %499 = vrot.lane.b32.xlu0 %v491, 115
        %v500 = vpop.permute.xlu0 %499
        %501 = vrot.lane.b32.xlu0 %v492, 115
        %v502 = vpop.permute.xlu0 %501
        %503 = vrot.lane.b32.xlu0 %v493, 115
        %v504 = vpop.permute.xlu0 %503
        %505 = vrot.lane.b32.xlu0 %v494, 115
        %v506 = vpop.permute.xlu0 %505
        %v511 = vsel %vm464, %v500, 0.0
        %v512 = vsel %vm464, %v502, 0.0
        %v513 = vsel %vm464, %v504, 0.0
        %v514 = vsel %vm464, %v506, 0.0
        %s515 = sld [smem:[#allocation10]]
        %v516 = vstv %s515
        %v517 = vmul.f32 %v511, %v516
        %v518 = vmul.f32 %v512, %v516
        %v519 = vmul.f32 %v513, %v516
        %v520 = vadd.f32 %v517, 0.0
        %v521 = vadd.f32 %v518, 0.0
        %v522 = vadd.f32 %v519, 0.0
        %s523 = sld [smem:[#allocation10 + $0x7]]
        %v524 = vstv %s523
        %v525 = vmul.f32 %v511, %v524
        %v526 = vmul.f32 %v512, %v524
        %v527 = vmul.f32 %v513, %v524
        %v528 = vadd.f32 %v525, 0.0
        %v529 = vadd.f32 %v526, 0.0
        %v530 = vadd.f32 %v527, 0.0
        %s531 = sld [smem:[#allocation10 + $0xe]]
        %v532 = vstv %s531
        %v533 = vmul.f32 %v511, %v532
        %v534 = vmul.f32 %v512, %v532
        %v535 = vmul.f32 %v513, %v532
        %v536 = vadd.f32 %v533, 0.0
        %v537 = vadd.f32 %v534, 0.0
        %v538 = vadd.f32 %v535, 0.0
        %s539 = sld [smem:[#allocation10 + $0x15]]
        %v540 = vstv %s539
        %v541 = vmul.f32 %v512, %v540
        %v542 = vmul.f32 %v513, %v540
        %v543 = vadd.f32 %v541, 0.0
        %v544 = vadd.f32 %v542, 0.0
        %s545 = sld [smem:[#allocation10 + $0x1c]]
        %v546 = vstv %s545
        %v547 = vmul.f32 %v512, %v546
        %v548 = vmul.f32 %v513, %v546
        %v549 = vmul.f32 %v514, %v546
        %vm553 = vcmask 1043456
        %v554 = vrot.slane %v547, 4
        %v555 = vrot.slane %v548, 4
        %v556 = vsel %vm553, %v554, %v555
        %v557 = vrot.slane %v549, 4
        %v558 = vsel %vm553, %v555, %v557
        %v562 = vadd.f32 %v520, %v554
        %v563 = vadd.f32 %v521, %v556
        %v564 = vadd.f32 %v522, %v558
        %s565 = sld [smem:[#allocation10 + $0x23]]
        %v566 = vstv %s565
        %v567 = vmul.f32 %v512, %v566
        %v568 = vmul.f32 %v513, %v566
        %v569 = vmul.f32 %v514, %v566
        %v573 = vrot.slane %v567, 4
        %v574 = vrot.slane %v568, 4
        %v575 = vsel %vm553, %v573, %v574
        %v576 = vrot.slane %v569, 4
        %v577 = vsel %vm553, %v574, %v576
        %v581 = vadd.f32 %v528, %v573
        %v582 = vadd.f32 %v529, %v575
        %v583 = vadd.f32 %v530, %v577
        %s584 = sld [smem:[#allocation10 + $0x2a]]
        %v585 = vstv %s584
        %v586 = vmul.f32 %v512, %v585
        %v587 = vmul.f32 %v513, %v585
        %v588 = vmul.f32 %v514, %v585
        %v592 = vrot.slane %v586, 4
        %v593 = vrot.slane %v587, 4
        %v594 = vsel %vm553, %v592, %v593
        %v595 = vrot.slane %v588, 4
        %v596 = vsel %vm553, %v593, %v595
        %v600 = vadd.f32 %v536, %v592
        %v601 = vadd.f32 %v537, %v594
        %v602 = vadd.f32 %v538, %v596
        %603 = vrot.lane.b32.xlu0 %v491, 114
        %v604 = vpop.permute.xlu0 %603
        %605 = vrot.lane.b32.xlu0 %v492, 114
        %v606 = vpop.permute.xlu0 %605
        %607 = vrot.lane.b32.xlu0 %v493, 114
        %v608 = vpop.permute.xlu0 %607
        %609 = vrot.lane.b32.xlu0 %v494, 114
        %v610 = vpop.permute.xlu0 %609
        %v615 = vsel %vm465, %v604, 0.0
        %v616 = vsel %vm465, %v606, 0.0
        %v617 = vsel %vm465, %v608, 0.0
        %v618 = vsel %vm465, %v610, 0.0
        %s619 = sld [smem:[#allocation10 + $0x1]]
        %v620 = vstv %s619
        %v621 = vmul.f32 %v615, %v620
        %v622 = vmul.f32 %v616, %v620
        %v623 = vmul.f32 %v617, %v620
        %v624 = vadd.f32 %v562, %v621
        %v625 = vadd.f32 %v563, %v622
        %v626 = vadd.f32 %v564, %v623
        %s627 = sld [smem:[#allocation10 + $0x8]]
        %v628 = vstv %s627
        %v629 = vmul.f32 %v615, %v628
        %v630 = vmul.f32 %v616, %v628
        %v631 = vmul.f32 %v617, %v628
        %v632 = vadd.f32 %v581, %v629
        %v633 = vadd.f32 %v582, %v630
        %v634 = vadd.f32 %v583, %v631
        %s635 = sld [smem:[#allocation10 + $0xf]]
        %v636 = vstv %s635
        %v637 = vmul.f32 %v615, %v636
        %v638 = vmul.f32 %v616, %v636
        %v639 = vmul.f32 %v617, %v636
        %v640 = vadd.f32 %v600, %v637
        %v641 = vadd.f32 %v601, %v638
        %v642 = vadd.f32 %v602, %v639
        %s643 = sld [smem:[#allocation10 + $0x16]]
        %v644 = vstv %s643
        %v645 = vmul.f32 %v616, %v644
        %v646 = vmul.f32 %v617, %v644
        %v647 = vadd.f32 %v543, %v645
        %v648 = vadd.f32 %v544, %v646
        %s649 = sld [smem:[#allocation10 + $0x1d]]
        %v650 = vstv %s649
        %v651 = vmul.f32 %v616, %v650
        %v652 = vmul.f32 %v617, %v650
        %v653 = vmul.f32 %v618, %v650
        %v657 = vrot.slane %v651, 4
        %v658 = vrot.slane %v652, 4
        %v659 = vsel %vm553, %v657, %v658
        %v660 = vrot.slane %v653, 4
        %v661 = vsel %vm553, %v658, %v660
        %v665 = vadd.f32 %v624, %v657
        %v666 = vadd.f32 %v625, %v659
        %v667 = vadd.f32 %v626, %v661
        %s668 = sld [smem:[#allocation10 + $0x24]]
        %v669 = vstv %s668
        %v670 = vmul.f32 %v616, %v669
        %v671 = vmul.f32 %v617, %v669
        %v672 = vmul.f32 %v618, %v669
        %v676 = vrot.slane %v670, 4
        %v677 = vrot.slane %v671, 4
        %v678 = vsel %vm553, %v676, %v677
        %v679 = vrot.slane %v672, 4
        %v680 = vsel %vm553, %v677, %v679
        %v684 = vadd.f32 %v632, %v676
        %v685 = vadd.f32 %v633, %v678
        %v686 = vadd.f32 %v634, %v680
        %s687 = sld [smem:[#allocation10 + $0x2b]]
        %v688 = vstv %s687
        %v689 = vmul.f32 %v616, %v688
        %v690 = vmul.f32 %v617, %v688
        %v691 = vmul.f32 %v618, %v688
        %v695 = vrot.slane %v689, 4
        %v696 = vrot.slane %v690, 4
        %v697 = vsel %vm553, %v695, %v696
        %v698 = vrot.slane %v691, 4
        %v699 = vsel %vm553, %v696, %v698
        %v703 = vadd.f32 %v640, %v695
        %v704 = vadd.f32 %v641, %v697
        %v705 = vadd.f32 %v642, %v699
        %706 = vrot.lane.b32.xlu0 %v491, 113
        %v707 = vpop.permute.xlu0 %706
        %708 = vrot.lane.b32.xlu0 %v492, 113
        %v709 = vpop.permute.xlu0 %708
        %710 = vrot.lane.b32.xlu0 %v493, 113
        %v711 = vpop.permute.xlu0 %710
        %712 = vrot.lane.b32.xlu0 %v494, 113
        %v713 = vpop.permute.xlu0 %712
        %v718 = vsel %vm466, %v707, 0.0
        %v719 = vsel %vm466, %v709, 0.0
        %v720 = vsel %vm466, %v711, 0.0
        %v721 = vsel %vm466, %v713, 0.0
        %s722 = sld [smem:[#allocation10 + $0x2]]
        %v723 = vstv %s722
        %v724 = vmul.f32 %v718, %v723
        %v725 = vmul.f32 %v719, %v723
        %v726 = vmul.f32 %v720, %v723
        %v727 = vadd.f32 %v665, %v724
        %v728 = vadd.f32 %v666, %v725
        %v729 = vadd.f32 %v667, %v726
        %s730 = sld [smem:[#allocation10 + $0x9]]
        %v731 = vstv %s730
        %v732 = vmul.f32 %v718, %v731
        %v733 = vmul.f32 %v719, %v731
        %v734 = vmul.f32 %v720, %v731
        %v735 = vadd.f32 %v684, %v732
        %v736 = vadd.f32 %v685, %v733
        %v737 = vadd.f32 %v686, %v734
        %s738 = sld [smem:[#allocation10 + $0x10]]
        %v739 = vstv %s738
        %v740 = vmul.f32 %v718, %v739
        %v741 = vmul.f32 %v719, %v739
        %v742 = vmul.f32 %v720, %v739
        %v743 = vadd.f32 %v703, %v740
        %v744 = vadd.f32 %v704, %v741
        %v745 = vadd.f32 %v705, %v742
        %s746 = sld [smem:[#allocation10 + $0x17]]
        %v747 = vstv %s746
        %v748 = vmul.f32 %v719, %v747
        %v749 = vmul.f32 %v720, %v747
        %v750 = vadd.f32 %v647, %v748
        %v751 = vadd.f32 %v648, %v749
        %s752 = sld [smem:[#allocation10 + $0x1e]]
        %v753 = vstv %s752
        %v754 = vmul.f32 %v719, %v753
        %v755 = vmul.f32 %v720, %v753
        %v756 = vmul.f32 %v721, %v753
        %v760 = vrot.slane %v754, 4
        %v761 = vrot.slane %v755, 4
        %v762 = vsel %vm553, %v760, %v761
        %v763 = vrot.slane %v756, 4
        %v764 = vsel %vm553, %v761, %v763
        %v768 = vadd.f32 %v727, %v760
        %v769 = vadd.f32 %v728, %v762
        %v770 = vadd.f32 %v729, %v764
        %s771 = sld [smem:[#allocation10 + $0x25]]
        %v772 = vstv %s771
        %v773 = vmul.f32 %v719, %v772
        %v774 = vmul.f32 %v720, %v772
        %v775 = vmul.f32 %v721, %v772
        %v779 = vrot.slane %v773, 4
        %v780 = vrot.slane %v774, 4
        %v781 = vsel %vm553, %v779, %v780
        %v782 = vrot.slane %v775, 4
        %v783 = vsel %vm553, %v780, %v782
        %v787 = vadd.f32 %v735, %v779
        %v788 = vadd.f32 %v736, %v781
        %v789 = vadd.f32 %v737, %v783
        %s790 = sld [smem:[#allocation10 + $0x2c]]
        %v791 = vstv %s790
        %v792 = vmul.f32 %v719, %v791
        %v793 = vmul.f32 %v720, %v791
        %v794 = vmul.f32 %v721, %v791
        %v798 = vrot.slane %v792, 4
        %v799 = vrot.slane %v793, 4
        %v800 = vsel %vm553, %v798, %v799
        %v801 = vrot.slane %v794, 4
        %v802 = vsel %vm553, %v799, %v801
        %v806 = vadd.f32 %v743, %v798
        %v807 = vadd.f32 %v744, %v800
        %v808 = vadd.f32 %v745, %v802
        %s809 = sld [smem:[#allocation10 + $0x3]]
        %v810 = vstv %s809
        %v811 = vmul.f32 %v452, %v810
        %v812 = vmul.f32 %v453, %v810
        %v813 = vmul.f32 %v454, %v810
        %v814 = vadd.f32 %v768, %v811
        %v815 = vadd.f32 %v769, %v812
        %v816 = vadd.f32 %v770, %v813
        %s817 = sld [smem:[#allocation10 + $0xa]]
        %v818 = vstv %s817
        %v819 = vmul.f32 %v452, %v818
        %v820 = vmul.f32 %v453, %v818
        %v821 = vmul.f32 %v454, %v818
        %v822 = vadd.f32 %v787, %v819
        %v823 = vadd.f32 %v788, %v820
        %v824 = vadd.f32 %v789, %v821
        %s825 = sld [smem:[#allocation10 + $0x11]]
        %v826 = vstv %s825
        %v827 = vmul.f32 %v452, %v826
        %v828 = vmul.f32 %v453, %v826
        %v829 = vmul.f32 %v454, %v826
        %v830 = vadd.f32 %v806, %v827
        %v831 = vadd.f32 %v807, %v828
        %v832 = vadd.f32 %v808, %v829
        %s833 = sld [smem:[#allocation10 + $0x18]]
        %v834 = vstv %s833
        %v835 = vmul.f32 %v453, %v834
        %v836 = vmul.f32 %v454, %v834
        %v837 = vadd.f32 %v750, %v835
        %v838 = vadd.f32 %v751, %v836
        %s839 = sld [smem:[#allocation10 + $0x1f]]
        %v840 = vstv %s839
        %v841 = vmul.f32 %v453, %v840
        %v842 = vmul.f32 %v454, %v840
        %v843 = vmul.f32 %v459, %v840
        %v847 = vrot.slane %v841, 4
        %v848 = vrot.slane %v842, 4
        %v849 = vsel %vm553, %v847, %v848
        %v850 = vrot.slane %v843, 4
        %v851 = vsel %vm553, %v848, %v850
        %v855 = vadd.f32 %v814, %v847
        %v856 = vadd.f32 %v815, %v849
        %v857 = vadd.f32 %v816, %v851
        %s858 = sld [smem:[#allocation10 + $0x26]]
        %v859 = vstv %s858
        %v860 = vmul.f32 %v453, %v859
        %v861 = vmul.f32 %v454, %v859
        %v862 = vmul.f32 %v459, %v859
        %v866 = vrot.slane %v860, 4
        %v867 = vrot.slane %v861, 4
        %v868 = vsel %vm553, %v866, %v867
        %v869 = vrot.slane %v862, 4
        %v870 = vsel %vm553, %v867, %v869
        %v874 = vadd.f32 %v822, %v866
        %v875 = vadd.f32 %v823, %v868
        %v876 = vadd.f32 %v824, %v870
        %s877 = sld [smem:[#allocation10 + $0x2d]]
        %v878 = vstv %s877
        %v879 = vmul.f32 %v453, %v878
        %v880 = vmul.f32 %v454, %v878
        %v881 = vmul.f32 %v459, %v878
        %v885 = vrot.slane %v879, 4
        %v886 = vrot.slane %v880, 4
        %v887 = vsel %vm553, %v885, %v886
        %v888 = vrot.slane %v881, 4
        %v889 = vsel %vm553, %v886, %v888
        %v893 = vadd.f32 %v830, %v885
        %v894 = vadd.f32 %v831, %v887
        %v895 = vadd.f32 %v832, %v889
        %896 = vrot.lane.b32.xlu0 %v491, 127
        %v897 = vpop.permute.xlu0 %896
        %898 = vrot.lane.b32.xlu0 %v492, 127
        %v899 = vpop.permute.xlu0 %898
        %900 = vrot.lane.b32.xlu0 %v493, 127
        %v901 = vpop.permute.xlu0 %900
        %902 = vrot.lane.b32.xlu0 %v494, 127
        %v903 = vpop.permute.xlu0 %902
        %v908 = vsel %vm467, %v897, 0.0
        %v909 = vsel %vm467, %v899, 0.0
        %v910 = vsel %vm467, %v901, 0.0
        %v911 = vsel %vm467, %v903, 0.0
        %s912 = sld [smem:[#allocation10 + $0x4]]
        %v913 = vstv %s912
        %v914 = vmul.f32 %v908, %v913
        %v915 = vmul.f32 %v909, %v913
        %v916 = vmul.f32 %v910, %v913
        %v917 = vadd.f32 %v855, %v914
        %v918 = vadd.f32 %v856, %v915
        %v919 = vadd.f32 %v857, %v916
        %s920 = sld [smem:[#allocation10 + $0xb]]
        %v921 = vstv %s920
        %v922 = vmul.f32 %v908, %v921
        %v923 = vmul.f32 %v909, %v921
        %v924 = vmul.f32 %v910, %v921
        %v925 = vadd.f32 %v874, %v922
        %v926 = vadd.f32 %v875, %v923
        %v927 = vadd.f32 %v876, %v924
        %s928 = sld [smem:[#allocation10 + $0x12]]
        %v929 = vstv %s928
        %v930 = vmul.f32 %v908, %v929
        %v931 = vmul.f32 %v909, %v929
        %v932 = vmul.f32 %v910, %v929
        %v933 = vadd.f32 %v893, %v930
        %v934 = vadd.f32 %v894, %v931
        %v935 = vadd.f32 %v895, %v932
        %s936 = sld [smem:[#allocation10 + $0x19]]
        %v937 = vstv %s936
        %v938 = vmul.f32 %v909, %v937
        %v939 = vmul.f32 %v910, %v937
        %v940 = vadd.f32 %v837, %v938
        %v941 = vadd.f32 %v838, %v939
        %s942 = sld [smem:[#allocation10 + $0x20]]
        %v943 = vstv %s942
        %v944 = vmul.f32 %v909, %v943
        %v945 = vmul.f32 %v910, %v943
        %v946 = vmul.f32 %v911, %v943
        %v950 = vrot.slane %v944, 4
        %v951 = vrot.slane %v945, 4
        %v952 = vsel %vm553, %v950, %v951
        %v953 = vrot.slane %v946, 4
        %v954 = vsel %vm553, %v951, %v953
        %v958 = vadd.f32 %v917, %v950
        %v959 = vadd.f32 %v918, %v952
        %v960 = vadd.f32 %v919, %v954
        %s961 = sld [smem:[#allocation10 + $0x27]]
        %v962 = vstv %s961
        %v963 = vmul.f32 %v909, %v962
        %v964 = vmul.f32 %v910, %v962
        %v965 = vmul.f32 %v911, %v962
        %v969 = vrot.slane %v963, 4
        %v970 = vrot.slane %v964, 4
        %v971 = vsel %vm553, %v969, %v970
        %v972 = vrot.slane %v965, 4
        %v973 = vsel %vm553, %v970, %v972
        %v977 = vadd.f32 %v925, %v969
        %v978 = vadd.f32 %v926, %v971
        %v979 = vadd.f32 %v927, %v973
        %s980 = sld [smem:[#allocation10 + $0x2e]]
        %v981 = vstv %s980
        %v982 = vmul.f32 %v909, %v981
        %v983 = vmul.f32 %v910, %v981
        %v984 = vmul.f32 %v911, %v981
        %v988 = vrot.slane %v982, 4
        %v989 = vrot.slane %v983, 4
        %v990 = vsel %vm553, %v988, %v989
        %v991 = vrot.slane %v984, 4
        %v992 = vsel %vm553, %v989, %v991
        %v996 = vadd.f32 %v933, %v988
        %v997 = vadd.f32 %v934, %v990
        %v998 = vadd.f32 %v935, %v992
        %999 = vrot.lane.b32.xlu0 %v491, 126
        %v1000 = vpop.permute.xlu0 %999
        %1001 = vrot.lane.b32.xlu0 %v492, 126
        %v1002 = vpop.permute.xlu0 %1001
        %1003 = vrot.lane.b32.xlu0 %v493, 126
        %v1004 = vpop.permute.xlu0 %1003
        %1005 = vrot.lane.b32.xlu0 %v494, 126
        %v1006 = vpop.permute.xlu0 %1005
        %v1011 = vsel %vm468, %v1000, 0.0
        %v1012 = vsel %vm468, %v1002, 0.0
        %v1013 = vsel %vm468, %v1004, 0.0
        %v1014 = vsel %vm468, %v1006, 0.0
        %s1015 = sld [smem:[#allocation10 + $0x5]]
        %v1016 = vstv %s1015
        %v1017 = vmul.f32 %v1011, %v1016
        %v1018 = vmul.f32 %v1012, %v1016
        %v1019 = vmul.f32 %v1013, %v1016
        %v1020 = vadd.f32 %v958, %v1017
        %v1021 = vadd.f32 %v959, %v1018
        %v1022 = vadd.f32 %v960, %v1019
        %s1023 = sld [smem:[#allocation10 + $0xc]]
        %v1024 = vstv %s1023
        %v1025 = vmul.f32 %v1011, %v1024
        %v1026 = vmul.f32 %v1012, %v1024
        %v1027 = vmul.f32 %v1013, %v1024
        %v1028 = vadd.f32 %v977, %v1025
        %v1029 = vadd.f32 %v978, %v1026
        %v1030 = vadd.f32 %v979, %v1027
        %s1031 = sld [smem:[#allocation10 + $0x13]]
        %v1032 = vstv %s1031
        %v1033 = vmul.f32 %v1011, %v1032
        %v1034 = vmul.f32 %v1012, %v1032
        %v1035 = vmul.f32 %v1013, %v1032
        %v1036 = vadd.f32 %v996, %v1033
        %v1037 = vadd.f32 %v997, %v1034
        %v1038 = vadd.f32 %v998, %v1035
        %s1039 = sld [smem:[#allocation10 + $0x1a]]
        %v1040 = vstv %s1039
        %v1041 = vmul.f32 %v1012, %v1040
        %v1042 = vmul.f32 %v1013, %v1040
        %v1043 = vadd.f32 %v940, %v1041
        %v1044 = vadd.f32 %v941, %v1042
        %s1045 = sld [smem:[#allocation10 + $0x21]]
        %v1046 = vstv %s1045
        %v1047 = vmul.f32 %v1012, %v1046
        %v1048 = vmul.f32 %v1013, %v1046
        %v1049 = vmul.f32 %v1014, %v1046
        %v1053 = vrot.slane %v1047, 4
        %v1054 = vrot.slane %v1048, 4
        %v1055 = vsel %vm553, %v1053, %v1054
        %v1056 = vrot.slane %v1049, 4
        %v1057 = vsel %vm553, %v1054, %v1056
        %v1061 = vadd.f32 %v1020, %v1053
        %v1062 = vadd.f32 %v1021, %v1055
        %v1063 = vadd.f32 %v1022, %v1057
        %s1064 = sld [smem:[#allocation10 + $0x28]]
        %v1065 = vstv %s1064
        %v1066 = vmul.f32 %v1012, %v1065
        %v1067 = vmul.f32 %v1013, %v1065
        %v1068 = vmul.f32 %v1014, %v1065
        %v1072 = vrot.slane %v1066, 4
        %v1073 = vrot.slane %v1067, 4
        %v1074 = vsel %vm553, %v1072, %v1073
        %v1075 = vrot.slane %v1068, 4
        %v1076 = vsel %vm553, %v1073, %v1075
        %v1080 = vadd.f32 %v1028, %v1072
        %v1081 = vadd.f32 %v1029, %v1074
        %v1082 = vadd.f32 %v1030, %v1076
        %s1083 = sld [smem:[#allocation10 + $0x2f]]
        %v1084 = vstv %s1083
        %v1085 = vmul.f32 %v1012, %v1084
        %v1086 = vmul.f32 %v1013, %v1084
        %v1087 = vmul.f32 %v1014, %v1084
        %v1091 = vrot.slane %v1085, 4
        %v1092 = vrot.slane %v1086, 4
        %v1093 = vsel %vm553, %v1091, %v1092
        %v1094 = vrot.slane %v1087, 4
        %v1095 = vsel %vm553, %v1092, %v1094
        %v1099 = vadd.f32 %v1036, %v1091
        %v1100 = vadd.f32 %v1037, %v1093
        %v1101 = vadd.f32 %v1038, %v1095
        %1102 = vrot.lane.b32.xlu0 %v491, 125
        %v1103 = vpop.permute.xlu0 %1102
        %1104 = vrot.lane.b32.xlu0 %v492, 125
        %v1105 = vpop.permute.xlu0 %1104
        %1106 = vrot.lane.b32.xlu0 %v493, 125
        %v1107 = vpop.permute.xlu0 %1106
        %1108 = vrot.lane.b32.xlu0 %v494, 125
        %v1109 = vpop.permute.xlu0 %1108
        %v1114 = vsel %vm469, %v1103, 0.0
        %v1115 = vsel %vm469, %v1105, 0.0
        %v1116 = vsel %vm469, %v1107, 0.0
        %v1117 = vsel %vm469, %v1109, 0.0
        %s1118 = sld [smem:[#allocation10 + $0x6]]
        %v1119 = vstv %s1118
        %v1120 = vmul.f32 %v1114, %v1119
        %v1121 = vmul.f32 %v1115, %v1119
        %v1122 = vmul.f32 %v1116, %v1119
        %v1123 = vadd.f32 %v1061, %v1120
        %v1124 = vadd.f32 %v1062, %v1121
        %v1125 = vadd.f32 %v1063, %v1122
        %s1126 = sld [smem:[#allocation10 + $0xd]]
        %v1127 = vstv %s1126
        %v1128 = vmul.f32 %v1114, %v1127
        %v1129 = vmul.f32 %v1115, %v1127
        %v1130 = vmul.f32 %v1116, %v1127
        %v1131 = vadd.f32 %v1080, %v1128
        %v1132 = vadd.f32 %v1081, %v1129
        %v1133 = vadd.f32 %v1082, %v1130
        %s1134 = sld [smem:[#allocation10 + $0x14]]
        %v1135 = vstv %s1134
        %v1136 = vmul.f32 %v1114, %v1135
        %v1137 = vmul.f32 %v1115, %v1135
        %v1138 = vmul.f32 %v1116, %v1135
        %v1139 = vadd.f32 %v1099, %v1136
        %v1140 = vadd.f32 %v1100, %v1137
        %v1141 = vadd.f32 %v1101, %v1138
        %s1142 = sld [smem:[#allocation10 + $0x1b]]
        %v1143 = vstv %s1142
        %v1144 = vmul.f32 %v1115, %v1143
        %v1145 = vmul.f32 %v1116, %v1143
        %v1146 = vadd.f32 %v1043, %v1144
        %v1147 = vadd.f32 %v1044, %v1145
        %s1148 = sld [smem:[#allocation10 + $0x22]]
        %v1149 = vstv %s1148
        %v1150 = vmul.f32 %v1115, %v1149
        %v1151 = vmul.f32 %v1116, %v1149
        %v1152 = vmul.f32 %v1117, %v1149
        %v1156 = vrot.slane %v1150, 4
        %v1157 = vrot.slane %v1151, 4
        %v1158 = vsel %vm553, %v1156, %v1157
        %v1159 = vrot.slane %v1152, 4
        %v1160 = vsel %vm553, %v1157, %v1159
        %v1164 = vadd.f32 %v1123, %v1156
        %v1165 = vadd.f32 %v1124, %v1158
        %v1166 = vadd.f32 %v1125, %v1160
        %s1167 = sld [smem:[#allocation10 + $0x29]]
        %v1168 = vstv %s1167
        %v1169 = vmul.f32 %v1115, %v1168
        %v1170 = vmul.f32 %v1116, %v1168
        %v1171 = vmul.f32 %v1117, %v1168
        %v1175 = vrot.slane %v1169, 4
        %v1176 = vrot.slane %v1170, 4
        %v1177 = vsel %vm553, %v1175, %v1176
        %v1178 = vrot.slane %v1171, 4
        %v1179 = vsel %vm553, %v1176, %v1178
        %v1183 = vadd.f32 %v1131, %v1175
        %v1184 = vadd.f32 %v1132, %v1177
        %v1185 = vadd.f32 %v1133, %v1179
        %s1186 = sld [smem:[#allocation10 + $0x30]]
        %v1187 = vstv %s1186
        %v1188 = vmul.f32 %v1115, %v1187
        %v1189 = vmul.f32 %v1116, %v1187
        %v1190 = vmul.f32 %v1117, %v1187
        %v1194 = vrot.slane %v1188, 4
        %v1195 = vrot.slane %v1189, 4
        %v1196 = vsel %vm553, %v1194, %v1195
        %v1197 = vrot.slane %v1190, 4
        %v1198 = vsel %vm553, %v1195, %v1197
        %v1202 = vadd.f32 %v1139, %v1194
        %v1203 = vadd.f32 %v1140, %v1196
        %v1204 = vadd.f32 %v1141, %v1198
        %1205 = vrot.lane.b32.xlu0 %v460, 16
        %v1206 = vpop.permute.xlu0 %1205
        %v1207 = vsel %vm470, %v1206, %v460
        %1208 = vrot.lane.b32.xlu0 %v440, 16
        %v1209 = vpop.permute.xlu0 %1208
        %v1210 = vsel %vm470, %v1209, %v440
        %1211 = vrot.lane.b32.xlu0 %v441, 16
        %v1212 = vpop.permute.xlu0 %1211
        %v1213 = vsel %vm470, %v1212, %v441
        %1214 = vrot.lane.b32.xlu0 %v461, 16
        %v1215 = vpop.permute.xlu0 %1214
        %v1216 = vsel %vm470, %v1215, %v461
        %1217 = vrot.lane.b32.xlu0 %v1207, 16
        %v1218 = vpop.permute.xlu0 %1217
        %1219 = vrot.lane.b32.xlu0 %v1210, 16
        %v1220 = vpop.permute.xlu0 %1219
        %1221 = vrot.lane.b32.xlu0 %v1213, 16
        %v1222 = vpop.permute.xlu0 %1221
        %1223 = vrot.lane.b32.xlu0 %v1216, 16
        %v1224 = vpop.permute.xlu0 %1223
        %v1225 = vsel %vm470, %v1218, %v460
        %v1226 = vsel %vm470, %v1220, %v440
        %v1227 = vsel %vm470, %v1222, %v441
        %v1228 = vsel %vm470, %v1224, %v461
        %1233 = vrot.lane.b32.xlu0 %v1225, 115
        %v1234 = vpop.permute.xlu0 %1233
        %1235 = vrot.lane.b32.xlu0 %v1226, 115
        %v1236 = vpop.permute.xlu0 %1235
        %1237 = vrot.lane.b32.xlu0 %v1227, 115
        %v1238 = vpop.permute.xlu0 %1237
        %1239 = vrot.lane.b32.xlu0 %v1228, 115
        %v1240 = vpop.permute.xlu0 %1239
        %v1245 = vsel %vm464, %v1234, 0.0
        %v1246 = vsel %vm464, %v1236, 0.0
        %v1247 = vsel %vm464, %v1238, 0.0
        %v1248 = vsel %vm464, %v1240, 0.0
        %s1249 = sld [smem:[#allocation10 + $0x31]]
        %v1250 = vstv %s1249
        %v1251 = vmul.f32 %v1245, %v1250
        %v1252 = vmul.f32 %v1246, %v1250
        %v1253 = vmul.f32 %v1247, %v1250
        %v1254 = vadd.f32 %v1164, %v1251
        %v1255 = vadd.f32 %v1165, %v1252
        %v1256 = vadd.f32 %v1166, %v1253
        %s1257 = sld [smem:[#allocation10 + $0x38]]
        %v1258 = vstv %s1257
        %v1259 = vmul.f32 %v1245, %v1258
        %v1260 = vmul.f32 %v1246, %v1258
        %v1261 = vmul.f32 %v1247, %v1258
        %v1262 = vadd.f32 %v1183, %v1259
        %v1263 = vadd.f32 %v1184, %v1260
        %v1264 = vadd.f32 %v1185, %v1261
        %s1265 = sld [smem:[#allocation10 + $0x3f]]
        %v1266 = vstv %s1265
        %v1267 = vmul.f32 %v1245, %v1266
        %v1268 = vmul.f32 %v1246, %v1266
        %v1269 = vmul.f32 %v1247, %v1266
        %v1270 = vadd.f32 %v1202, %v1267
        %v1271 = vadd.f32 %v1203, %v1268
        %v1272 = vadd.f32 %v1204, %v1269
        %s1273 = sld [smem:[#allocation10 + $0x46]]
        %v1274 = vstv %s1273
        %v1275 = vmul.f32 %v1246, %v1274
        %v1276 = vmul.f32 %v1247, %v1274
        %v1277 = vadd.f32 %v1146, %v1275
        %v1278 = vadd.f32 %v1147, %v1276
        %s1279 = sld [smem:[#allocation10 + $0x4d]]
        %v1280 = vstv %s1279
        %v1281 = vmul.f32 %v1246, %v1280
        %v1282 = vmul.f32 %v1247, %v1280
        %v1283 = vmul.f32 %v1248, %v1280
        %v1287 = vrot.slane %v1281, 4
        %v1288 = vrot.slane %v1282, 4
        %v1289 = vsel %vm553, %v1287, %v1288
        %v1290 = vrot.slane %v1283, 4
        %v1291 = vsel %vm553, %v1288, %v1290
        %v1295 = vadd.f32 %v1254, %v1287
        %v1296 = vadd.f32 %v1255, %v1289
        %v1297 = vadd.f32 %v1256, %v1291
        %s1298 = sld [smem:[#allocation10 + $0x54]]
        %v1299 = vstv %s1298
        %v1300 = vmul.f32 %v1246, %v1299
        %v1301 = vmul.f32 %v1247, %v1299
        %v1302 = vmul.f32 %v1248, %v1299
        %v1306 = vrot.slane %v1300, 4
        %v1307 = vrot.slane %v1301, 4
        %v1308 = vsel %vm553, %v1306, %v1307
        %v1309 = vrot.slane %v1302, 4
        %v1310 = vsel %vm553, %v1307, %v1309
        %v1314 = vadd.f32 %v1262, %v1306
        %v1315 = vadd.f32 %v1263, %v1308
        %v1316 = vadd.f32 %v1264, %v1310
        %s1317 = sld [smem:[#allocation10 + $0x5b]]
        %v1318 = vstv %s1317
        %v1319 = vmul.f32 %v1246, %v1318
        %v1320 = vmul.f32 %v1247, %v1318
        %v1321 = vmul.f32 %v1248, %v1318
        %v1325 = vrot.slane %v1319, 4
        %v1326 = vrot.slane %v1320, 4
        %v1327 = vsel %vm553, %v1325, %v1326
        %v1328 = vrot.slane %v1321, 4
        %v1329 = vsel %vm553, %v1326, %v1328
        %v1333 = vadd.f32 %v1270, %v1325
        %v1334 = vadd.f32 %v1271, %v1327
        %v1335 = vadd.f32 %v1272, %v1329
        %1336 = vrot.lane.b32.xlu0 %v1225, 114
        %v1337 = vpop.permute.xlu0 %1336
        %1338 = vrot.lane.b32.xlu0 %v1226, 114
        %v1339 = vpop.permute.xlu0 %1338
        %1340 = vrot.lane.b32.xlu0 %v1227, 114
        %v1341 = vpop.permute.xlu0 %1340
        %1342 = vrot.lane.b32.xlu0 %v1228, 114
        %v1343 = vpop.permute.xlu0 %1342
        %v1348 = vsel %vm465, %v1337, 0.0
        %v1349 = vsel %vm465, %v1339, 0.0
        %v1350 = vsel %vm465, %v1341, 0.0
        %v1351 = vsel %vm465, %v1343, 0.0
        %s1352 = sld [smem:[#allocation10 + $0x32]]
        %v1353 = vstv %s1352
        %v1354 = vmul.f32 %v1348, %v1353
        %v1355 = vmul.f32 %v1349, %v1353
        %v1356 = vmul.f32 %v1350, %v1353
        %v1357 = vadd.f32 %v1295, %v1354
        %v1358 = vadd.f32 %v1296, %v1355
        %v1359 = vadd.f32 %v1297, %v1356
        %s1360 = sld [smem:[#allocation10 + $0x39]]
        %v1361 = vstv %s1360
        %v1362 = vmul.f32 %v1348, %v1361
        %v1363 = vmul.f32 %v1349, %v1361
        %v1364 = vmul.f32 %v1350, %v1361
        %v1365 = vadd.f32 %v1314, %v1362
        %v1366 = vadd.f32 %v1315, %v1363
        %v1367 = vadd.f32 %v1316, %v1364
        %s1368 = sld [smem:[#allocation10 + $0x40]]
        %v1369 = vstv %s1368
        %v1370 = vmul.f32 %v1348, %v1369
        %v1371 = vmul.f32 %v1349, %v1369
        %v1372 = vmul.f32 %v1350, %v1369
        %v1373 = vadd.f32 %v1333, %v1370
        %v1374 = vadd.f32 %v1334, %v1371
        %v1375 = vadd.f32 %v1335, %v1372
        %s1376 = sld [smem:[#allocation10 + $0x47]]
        %v1377 = vstv %s1376
        %v1378 = vmul.f32 %v1349, %v1377
        %v1379 = vmul.f32 %v1350, %v1377
        %v1380 = vadd.f32 %v1277, %v1378
        %v1381 = vadd.f32 %v1278, %v1379
        %s1382 = sld [smem:[#allocation10 + $0x4e]]
        %v1383 = vstv %s1382
        %v1384 = vmul.f32 %v1349, %v1383
        %v1385 = vmul.f32 %v1350, %v1383
        %v1386 = vmul.f32 %v1351, %v1383
        %v1390 = vrot.slane %v1384, 4
        %v1391 = vrot.slane %v1385, 4
        %v1392 = vsel %vm553, %v1390, %v1391
        %v1393 = vrot.slane %v1386, 4
        %v1394 = vsel %vm553, %v1391, %v1393
        %v1398 = vadd.f32 %v1357, %v1390
        %v1399 = vadd.f32 %v1358, %v1392
        %v1400 = vadd.f32 %v1359, %v1394
        %s1401 = sld [smem:[#allocation10 + $0x55]]
        %v1402 = vstv %s1401
        %v1403 = vmul.f32 %v1349, %v1402
        %v1404 = vmul.f32 %v1350, %v1402
        %v1405 = vmul.f32 %v1351, %v1402
        %v1409 = vrot.slane %v1403, 4
        %v1410 = vrot.slane %v1404, 4
        %v1411 = vsel %vm553, %v1409, %v1410
        %v1412 = vrot.slane %v1405, 4
        %v1413 = vsel %vm553, %v1410, %v1412
        %v1417 = vadd.f32 %v1365, %v1409
        %v1418 = vadd.f32 %v1366, %v1411
        %v1419 = vadd.f32 %v1367, %v1413
        %s1420 = sld [smem:[#allocation10 + $0x5c]]
        %v1421 = vstv %s1420
        %v1422 = vmul.f32 %v1349, %v1421
        %v1423 = vmul.f32 %v1350, %v1421
        %v1424 = vmul.f32 %v1351, %v1421
        %v1428 = vrot.slane %v1422, 4
        %v1429 = vrot.slane %v1423, 4
        %v1430 = vsel %vm553, %v1428, %v1429
        %v1431 = vrot.slane %v1424, 4
        %v1432 = vsel %vm553, %v1429, %v1431
        %v1436 = vadd.f32 %v1373, %v1428
        %v1437 = vadd.f32 %v1374, %v1430
        %v1438 = vadd.f32 %v1375, %v1432
        %1439 = vrot.lane.b32.xlu0 %v1225, 113
        %v1440 = vpop.permute.xlu0 %1439
        %1441 = vrot.lane.b32.xlu0 %v1226, 113
        %v1442 = vpop.permute.xlu0 %1441
        %1443 = vrot.lane.b32.xlu0 %v1227, 113
        %v1444 = vpop.permute.xlu0 %1443
        %1445 = vrot.lane.b32.xlu0 %v1228, 113
        %v1446 = vpop.permute.xlu0 %1445
        %v1451 = vsel %vm466, %v1440, 0.0
        %v1452 = vsel %vm466, %v1442, 0.0
        %v1453 = vsel %vm466, %v1444, 0.0
        %v1454 = vsel %vm466, %v1446, 0.0
        %s1455 = sld [smem:[#allocation10 + $0x33]]
        %v1456 = vstv %s1455
        %v1457 = vmul.f32 %v1451, %v1456
        %v1458 = vmul.f32 %v1452, %v1456
        %v1459 = vmul.f32 %v1453, %v1456
        %v1460 = vadd.f32 %v1398, %v1457
        %v1461 = vadd.f32 %v1399, %v1458
        %v1462 = vadd.f32 %v1400, %v1459
        %s1463 = sld [smem:[#allocation10 + $0x3a]]
        %v1464 = vstv %s1463
        %v1465 = vmul.f32 %v1451, %v1464
        %v1466 = vmul.f32 %v1452, %v1464
        %v1467 = vmul.f32 %v1453, %v1464
        %v1468 = vadd.f32 %v1417, %v1465
        %v1469 = vadd.f32 %v1418, %v1466
        %v1470 = vadd.f32 %v1419, %v1467
        %s1471 = sld [smem:[#allocation10 + $0x41]]
        %v1472 = vstv %s1471
        %v1473 = vmul.f32 %v1451, %v1472
        %v1474 = vmul.f32 %v1452, %v1472
        %v1475 = vmul.f32 %v1453, %v1472
        %v1476 = vadd.f32 %v1436, %v1473
        %v1477 = vadd.f32 %v1437, %v1474
        %v1478 = vadd.f32 %v1438, %v1475
        %s1479 = sld [smem:[#allocation10 + $0x48]]
        %v1480 = vstv %s1479
        %v1481 = vmul.f32 %v1452, %v1480
        %v1482 = vmul.f32 %v1453, %v1480
        %v1483 = vadd.f32 %v1380, %v1481
        %v1484 = vadd.f32 %v1381, %v1482
        %s1485 = sld [smem:[#allocation10 + $0x4f]]
        %v1486 = vstv %s1485
        %v1487 = vmul.f32 %v1452, %v1486
        %v1488 = vmul.f32 %v1453, %v1486
        %v1489 = vmul.f32 %v1454, %v1486
        %v1493 = vrot.slane %v1487, 4
        %v1494 = vrot.slane %v1488, 4
        %v1495 = vsel %vm553, %v1493, %v1494
        %v1496 = vrot.slane %v1489, 4
        %v1497 = vsel %vm553, %v1494, %v1496
        %v1501 = vadd.f32 %v1460, %v1493
        %v1502 = vadd.f32 %v1461, %v1495
        %v1503 = vadd.f32 %v1462, %v1497
        %s1504 = sld [smem:[#allocation10 + $0x56]]
        %v1505 = vstv %s1504
        %v1506 = vmul.f32 %v1452, %v1505
        %v1507 = vmul.f32 %v1453, %v1505
        %v1508 = vmul.f32 %v1454, %v1505
        %v1512 = vrot.slane %v1506, 4
        %v1513 = vrot.slane %v1507, 4
        %v1514 = vsel %vm553, %v1512, %v1513
        %v1515 = vrot.slane %v1508, 4
        %v1516 = vsel %vm553, %v1513, %v1515
        %v1520 = vadd.f32 %v1468, %v1512
        %v1521 = vadd.f32 %v1469, %v1514
        %v1522 = vadd.f32 %v1470, %v1516
        %s1523 = sld [smem:[#allocation10 + $0x5d]]
        %v1524 = vstv %s1523
        %v1525 = vmul.f32 %v1452, %v1524
        %v1526 = vmul.f32 %v1453, %v1524
        %v1527 = vmul.f32 %v1454, %v1524
        %v1531 = vrot.slane %v1525, 4
        %v1532 = vrot.slane %v1526, 4
        %v1533 = vsel %vm553, %v1531, %v1532
        %v1534 = vrot.slane %v1527, 4
        %v1535 = vsel %vm553, %v1532, %v1534
        %v1539 = vadd.f32 %v1476, %v1531
        %v1540 = vadd.f32 %v1477, %v1533
        %v1541 = vadd.f32 %v1478, %v1535
        %s1542 = sld [smem:[#allocation10 + $0x34]]
        %v1543 = vstv %s1542
        %v1544 = vmul.f32 %v460, %v1543
        %v1545 = vmul.f32 %v440, %v1543
        %v1546 = vmul.f32 %v441, %v1543
        %v1547 = vadd.f32 %v1501, %v1544
        %v1548 = vadd.f32 %v1502, %v1545
        %v1549 = vadd.f32 %v1503, %v1546
        %s1550 = sld [smem:[#allocation10 + $0x3b]]
        %v1551 = vstv %s1550
        %v1552 = vmul.f32 %v460, %v1551
        %v1553 = vmul.f32 %v440, %v1551
        %v1554 = vmul.f32 %v441, %v1551
        %v1555 = vadd.f32 %v1520, %v1552
        %v1556 = vadd.f32 %v1521, %v1553
        %v1557 = vadd.f32 %v1522, %v1554
        %s1558 = sld [smem:[#allocation10 + $0x42]]
        %v1559 = vstv %s1558
        %v1560 = vmul.f32 %v460, %v1559
        %v1561 = vmul.f32 %v440, %v1559
        %v1562 = vmul.f32 %v441, %v1559
        %v1563 = vadd.f32 %v1539, %v1560
        %v1564 = vadd.f32 %v1540, %v1561
        %v1565 = vadd.f32 %v1541, %v1562
        %s1566 = sld [smem:[#allocation10 + $0x49]]
        %v1567 = vstv %s1566
        %v1568 = vmul.f32 %v440, %v1567
        %v1569 = vmul.f32 %v441, %v1567
        %v1570 = vadd.f32 %v1483, %v1568
        %v1571 = vadd.f32 %v1484, %v1569
        %s1572 = sld [smem:[#allocation10 + $0x50]]
        %v1573 = vstv %s1572
        %v1574 = vmul.f32 %v440, %v1573
        %v1575 = vmul.f32 %v441, %v1573
        %v1576 = vmul.f32 %v461, %v1573
        %v1580 = vrot.slane %v1574, 4
        %v1581 = vrot.slane %v1575, 4
        %v1582 = vsel %vm553, %v1580, %v1581
        %v1583 = vrot.slane %v1576, 4
        %v1584 = vsel %vm553, %v1581, %v1583
        %v1588 = vadd.f32 %v1547, %v1580
        %v1589 = vadd.f32 %v1548, %v1582
        %v1590 = vadd.f32 %v1549, %v1584
        %s1591 = sld [smem:[#allocation10 + $0x57]]
        %v1592 = vstv %s1591
        %v1593 = vmul.f32 %v440, %v1592
        %v1594 = vmul.f32 %v441, %v1592
        %v1595 = vmul.f32 %v461, %v1592
        %v1599 = vrot.slane %v1593, 4
        %v1600 = vrot.slane %v1594, 4
        %v1601 = vsel %vm553, %v1599, %v1600
        %v1602 = vrot.slane %v1595, 4
        %v1603 = vsel %vm553, %v1600, %v1602
        %v1607 = vadd.f32 %v1555, %v1599
        %v1608 = vadd.f32 %v1556, %v1601
        %v1609 = vadd.f32 %v1557, %v1603
        %s1610 = sld [smem:[#allocation10 + $0x5e]]
        %v1611 = vstv %s1610
        %v1612 = vmul.f32 %v440, %v1611
        %v1613 = vmul.f32 %v441, %v1611
        %v1614 = vmul.f32 %v461, %v1611
        %v1618 = vrot.slane %v1612, 4
        %v1619 = vrot.slane %v1613, 4
        %v1620 = vsel %vm553, %v1618, %v1619
        %v1621 = vrot.slane %v1614, 4
        %v1622 = vsel %vm553, %v1619, %v1621
        %v1626 = vadd.f32 %v1563, %v1618
        %v1627 = vadd.f32 %v1564, %v1620
        %v1628 = vadd.f32 %v1565, %v1622
        %1629 = vrot.lane.b32.xlu0 %v1225, 127
        %v1630 = vpop.permute.xlu0 %1629
        %1631 = vrot.lane.b32.xlu0 %v1226, 127
        %v1632 = vpop.permute.xlu0 %1631
        %1633 = vrot.lane.b32.xlu0 %v1227, 127
        %v1634 = vpop.permute.xlu0 %1633
        %1635 = vrot.lane.b32.xlu0 %v1228, 127
        %v1636 = vpop.permute.xlu0 %1635
        %v1641 = vsel %vm467, %v1630, 0.0
        %v1642 = vsel %vm467, %v1632, 0.0
        %v1643 = vsel %vm467, %v1634, 0.0
        %v1644 = vsel %vm467, %v1636, 0.0
        %s1645 = sld [smem:[#allocation10 + $0x35]]
        %v1646 = vstv %s1645
        %v1647 = vmul.f32 %v1641, %v1646
        %v1648 = vmul.f32 %v1642, %v1646
        %v1649 = vmul.f32 %v1643, %v1646
        %v1650 = vadd.f32 %v1588, %v1647
        %v1651 = vadd.f32 %v1589, %v1648
        %v1652 = vadd.f32 %v1590, %v1649
        %s1653 = sld [smem:[#allocation10 + $0x3c]]
        %v1654 = vstv %s1653
        %v1655 = vmul.f32 %v1641, %v1654
        %v1656 = vmul.f32 %v1642, %v1654
        %v1657 = vmul.f32 %v1643, %v1654
        %v1658 = vadd.f32 %v1607, %v1655
        %v1659 = vadd.f32 %v1608, %v1656
        %v1660 = vadd.f32 %v1609, %v1657
        %s1661 = sld [smem:[#allocation10 + $0x43]]
        %v1662 = vstv %s1661
        %v1663 = vmul.f32 %v1641, %v1662
        %v1664 = vmul.f32 %v1642, %v1662
        %v1665 = vmul.f32 %v1643, %v1662
        %v1666 = vadd.f32 %v1626, %v1663
        %v1667 = vadd.f32 %v1627, %v1664
        %v1668 = vadd.f32 %v1628, %v1665
        %s1669 = sld [smem:[#allocation10 + $0x4a]]
        %v1670 = vstv %s1669
        %v1671 = vmul.f32 %v1642, %v1670
        %v1672 = vmul.f32 %v1643, %v1670
        %v1673 = vadd.f32 %v1570, %v1671
        %v1674 = vadd.f32 %v1571, %v1672
        %s1675 = sld [smem:[#allocation10 + $0x51]]
        %v1676 = vstv %s1675
        %v1677 = vmul.f32 %v1642, %v1676
        %v1678 = vmul.f32 %v1643, %v1676
        %v1679 = vmul.f32 %v1644, %v1676
        %v1683 = vrot.slane %v1677, 4
        %v1684 = vrot.slane %v1678, 4
        %v1685 = vsel %vm553, %v1683, %v1684
        %v1686 = vrot.slane %v1679, 4
        %v1687 = vsel %vm553, %v1684, %v1686
        %v1691 = vadd.f32 %v1650, %v1683
        %v1692 = vadd.f32 %v1651, %v1685
        %v1693 = vadd.f32 %v1652, %v1687
        %s1694 = sld [smem:[#allocation10 + $0x58]]
        %v1695 = vstv %s1694
        %v1696 = vmul.f32 %v1642, %v1695
        %v1697 = vmul.f32 %v1643, %v1695
        %v1698 = vmul.f32 %v1644, %v1695
        %v1702 = vrot.slane %v1696, 4
        %v1703 = vrot.slane %v1697, 4
        %v1704 = vsel %vm553, %v1702, %v1703
        %v1705 = vrot.slane %v1698, 4
        %v1706 = vsel %vm553, %v1703, %v1705
        %v1710 = vadd.f32 %v1658, %v1702
        %v1711 = vadd.f32 %v1659, %v1704
        %v1712 = vadd.f32 %v1660, %v1706
        %s1713 = sld [smem:[#allocation10 + $0x5f]]
        %v1714 = vstv %s1713
        %v1715 = vmul.f32 %v1642, %v1714
        %v1716 = vmul.f32 %v1643, %v1714
        %v1717 = vmul.f32 %v1644, %v1714
        %v1721 = vrot.slane %v1715, 4
        %v1722 = vrot.slane %v1716, 4
        %v1723 = vsel %vm553, %v1721, %v1722
        %v1724 = vrot.slane %v1717, 4
        %v1725 = vsel %vm553, %v1722, %v1724
        %v1729 = vadd.f32 %v1666, %v1721
        %v1730 = vadd.f32 %v1667, %v1723
        %v1731 = vadd.f32 %v1668, %v1725
        %1732 = vrot.lane.b32.xlu0 %v1225, 126
        %v1733 = vpop.permute.xlu0 %1732
        %1734 = vrot.lane.b32.xlu0 %v1226, 126
        %v1735 = vpop.permute.xlu0 %1734
        %1736 = vrot.lane.b32.xlu0 %v1227, 126
        %v1737 = vpop.permute.xlu0 %1736
        %1738 = vrot.lane.b32.xlu0 %v1228, 126
        %v1739 = vpop.permute.xlu0 %1738
        %v1744 = vsel %vm468, %v1733, 0.0
        %v1745 = vsel %vm468, %v1735, 0.0
        %v1746 = vsel %vm468, %v1737, 0.0
        %v1747 = vsel %vm468, %v1739, 0.0
        %s1748 = sld [smem:[#allocation10 + $0x36]]
        %v1749 = vstv %s1748
        %v1750 = vmul.f32 %v1744, %v1749
        %v1751 = vmul.f32 %v1745, %v1749
        %v1752 = vmul.f32 %v1746, %v1749
        %v1753 = vadd.f32 %v1691, %v1750
        %v1754 = vadd.f32 %v1692, %v1751
        %v1755 = vadd.f32 %v1693, %v1752
        %s1756 = sld [smem:[#allocation10 + $0x3d]]
        %v1757 = vstv %s1756
        %v1758 = vmul.f32 %v1744, %v1757
        %v1759 = vmul.f32 %v1745, %v1757
        %v1760 = vmul.f32 %v1746, %v1757
        %v1761 = vadd.f32 %v1710, %v1758
        %v1762 = vadd.f32 %v1711, %v1759
        %v1763 = vadd.f32 %v1712, %v1760
        %s1764 = sld [smem:[#allocation10 + $0x44]]
        %v1765 = vstv %s1764
        %v1766 = vmul.f32 %v1744, %v1765
        %v1767 = vmul.f32 %v1745, %v1765
        %v1768 = vmul.f32 %v1746, %v1765
        %v1769 = vadd.f32 %v1729, %v1766
        %v1770 = vadd.f32 %v1730, %v1767
        %v1771 = vadd.f32 %v1731, %v1768
        %s1772 = sld [smem:[#allocation10 + $0x4b]]
        %v1773 = vstv %s1772
        %v1774 = vmul.f32 %v1745, %v1773
        %v1775 = vmul.f32 %v1746, %v1773
        %v1776 = vadd.f32 %v1673, %v1774
        %v1777 = vadd.f32 %v1674, %v1775
        %s1778 = sld [smem:[#allocation10 + $0x52]]
        %v1779 = vstv %s1778
        %v1780 = vmul.f32 %v1745, %v1779
        %v1781 = vmul.f32 %v1746, %v1779
        %v1782 = vmul.f32 %v1747, %v1779
        %v1786 = vrot.slane %v1780, 4
        %v1787 = vrot.slane %v1781, 4
        %v1788 = vsel %vm553, %v1786, %v1787
        %v1789 = vrot.slane %v1782, 4
        %v1790 = vsel %vm553, %v1787, %v1789
        %v1794 = vadd.f32 %v1753, %v1786
        %v1795 = vadd.f32 %v1754, %v1788
        %v1796 = vadd.f32 %v1755, %v1790
        %s1797 = sld [smem:[#allocation10 + $0x59]]
        %v1798 = vstv %s1797
        %v1799 = vmul.f32 %v1745, %v1798
        %v1800 = vmul.f32 %v1746, %v1798
        %v1801 = vmul.f32 %v1747, %v1798
        %v1805 = vrot.slane %v1799, 4
        %v1806 = vrot.slane %v1800, 4
        %v1807 = vsel %vm553, %v1805, %v1806
        %v1808 = vrot.slane %v1801, 4
        %v1809 = vsel %vm553, %v1806, %v1808
        %v1813 = vadd.f32 %v1761, %v1805
        %v1814 = vadd.f32 %v1762, %v1807
        %v1815 = vadd.f32 %v1763, %v1809
        %s1816 = sld [smem:[#allocation10 + $0x60]]
        %v1817 = vstv %s1816
        %v1818 = vmul.f32 %v1745, %v1817
        %v1819 = vmul.f32 %v1746, %v1817
        %v1820 = vmul.f32 %v1747, %v1817
        %v1824 = vrot.slane %v1818, 4
        %v1825 = vrot.slane %v1819, 4
        %v1826 = vsel %vm553, %v1824, %v1825
        %v1827 = vrot.slane %v1820, 4
        %v1828 = vsel %vm553, %v1825, %v1827
        %v1832 = vadd.f32 %v1769, %v1824
        %v1833 = vadd.f32 %v1770, %v1826
        %v1834 = vadd.f32 %v1771, %v1828
        %1835 = vrot.lane.b32.xlu0 %v1225, 125
        %v1836 = vpop.permute.xlu0 %1835
        %1837 = vrot.lane.b32.xlu0 %v1226, 125
        %v1838 = vpop.permute.xlu0 %1837
        %1839 = vrot.lane.b32.xlu0 %v1227, 125
        %v1840 = vpop.permute.xlu0 %1839
        %1841 = vrot.lane.b32.xlu0 %v1228, 125
        %v1842 = vpop.permute.xlu0 %1841
        %v1847 = vsel %vm469, %v1836, 0.0
        %v1848 = vsel %vm469, %v1838, 0.0
        %v1849 = vsel %vm469, %v1840, 0.0
        %v1850 = vsel %vm469, %v1842, 0.0
        %s1851 = sld [smem:[#allocation10 + $0x37]]
        %v1852 = vstv %s1851
        %v1853 = vmul.f32 %v1847, %v1852
        %v1854 = vmul.f32 %v1848, %v1852
        %v1855 = vmul.f32 %v1849, %v1852
        %v1856 = vadd.f32 %v1794, %v1853
        %v1857 = vadd.f32 %v1795, %v1854
        %v1858 = vadd.f32 %v1796, %v1855
        %s1859 = sld [smem:[#allocation10 + $0x3e]]
        %v1860 = vstv %s1859
        %v1861 = vmul.f32 %v1847, %v1860
        %v1862 = vmul.f32 %v1848, %v1860
        %v1863 = vmul.f32 %v1849, %v1860
        %v1864 = vadd.f32 %v1813, %v1861
        %v1865 = vadd.f32 %v1814, %v1862
        %v1866 = vadd.f32 %v1815, %v1863
        %s1867 = sld [smem:[#allocation10 + $0x45]]
        %v1868 = vstv %s1867
        %v1869 = vmul.f32 %v1847, %v1868
        %v1870 = vmul.f32 %v1848, %v1868
        %v1871 = vmul.f32 %v1849, %v1868
        %v1872 = vadd.f32 %v1832, %v1869
        %v1873 = vadd.f32 %v1833, %v1870
        %v1874 = vadd.f32 %v1834, %v1871
        %s1875 = sld [smem:[#allocation10 + $0x4c]]
        %v1876 = vstv %s1875
        %v1877 = vmul.f32 %v1848, %v1876
        %v1878 = vmul.f32 %v1849, %v1876
        %v1879 = vadd.f32 %v1776, %v1877
        %v1880 = vadd.f32 %v1777, %v1878
        %s1881 = sld [smem:[#allocation10 + $0x53]]
        %v1882 = vstv %s1881
        %v1883 = vmul.f32 %v1848, %v1882
        %v1884 = vmul.f32 %v1849, %v1882
        %v1885 = vmul.f32 %v1850, %v1882
        %v1889 = vrot.slane %v1883, 4
        %v1890 = vrot.slane %v1884, 4
        %v1891 = vsel %vm553, %v1889, %v1890
        %v1892 = vrot.slane %v1885, 4
        %v1893 = vsel %vm553, %v1890, %v1892
        %v1897 = vadd.f32 %v1856, %v1889
        %v1898 = vadd.f32 %v1857, %v1891
        %v1899 = vadd.f32 %v1858, %v1893
        %s1900 = sld [smem:[#allocation10 + $0x5a]]
        %v1901 = vstv %s1900
        %v1902 = vmul.f32 %v1848, %v1901
        %v1903 = vmul.f32 %v1849, %v1901
        %v1904 = vmul.f32 %v1850, %v1901
        %v1908 = vrot.slane %v1902, 4
        %v1909 = vrot.slane %v1903, 4
        %v1910 = vsel %vm553, %v1908, %v1909
        %v1911 = vrot.slane %v1904, 4
        %v1912 = vsel %vm553, %v1909, %v1911
        %v1916 = vadd.f32 %v1864, %v1908
        %v1917 = vadd.f32 %v1865, %v1910
        %v1918 = vadd.f32 %v1866, %v1912
        %s1919 = sld [smem:[#allocation10 + $0x61]]
        %v1920 = vstv %s1919
        %v1921 = vmul.f32 %v1848, %v1920
        %v1922 = vmul.f32 %v1849, %v1920
        %v1923 = vmul.f32 %v1850, %v1920
        %v1927 = vrot.slane %v1921, 4
        %v1928 = vrot.slane %v1922, 4
        %v1929 = vsel %vm553, %v1927, %v1928
        %v1930 = vrot.slane %v1923, 4
        %v1931 = vsel %vm553, %v1928, %v1930
        %v1935 = vadd.f32 %v1872, %v1927
        %v1936 = vadd.f32 %v1873, %v1929
        %v1937 = vadd.f32 %v1874, %v1931
        %vm1941 = vcmask 1046528
        %v1942 = vrot.slane %v1916, 1
        %v1943 = vrot.slane %v1917, 1
        %v1944 = vsel %vm1941, %v1942, %v1943
        %v1945 = vrot.slane %v1918, 1
        %v1946 = vsel %vm1941, %v1943, %v1945
        %v1950 = vadd.f32 %v1897, %v1944
        %v1951 = vadd.f32 %v1898, %v1946
        %v1952 = vadd.f32 %v1899, %v1945
        %v1955 = vrot.slane %v1879, 1
        %v1956 = vrot.slane %v1880, 1
        %v1957 = vsel %vm1941, %v1955, %v1956
        %v1961 = vadd.f32 %v1935, %v1955
        %v1962 = vadd.f32 %v1936, %v1957
        %v1963 = vadd.f32 %v1937, %v1956
        %vm1967 = vcmask 1045504
        %v1968 = vrot.slane %v1961, 2
        %v1969 = vrot.slane %v1962, 2
        %v1970 = vsel %vm1967, %v1968, %v1969
        %v1971 = vrot.slane %v1963, 2
        %v1972 = vsel %vm1967, %v1969, %v1971
        %v1976 = vadd.f32 %v1950, %v1970
        %v1977 = vadd.f32 %v1951, %v1972
        %v1978 = vadd.f32 %v1952, %v1971
        %s1979 = sld [smem:[#allocation2]]
        %v1980 = vstv %s1979
        %v1981 = vadd.f32 %v1976, %v1980
        %v1982 = vadd.f32 %v1977, %v1980
        %v1983 = vadd.f32 %v1978, %v1980
        %v1984 = vxor.u32 %v1981, 2147483648
        %v1985 = vxor.u32 %v1982, 2147483648
        %v1986 = vxor.u32 %v1983, 2147483648
        %v1987 = vmul.f32 %v1984, 1.442695
        %v1988 = vpow.pop %v1987
        %v1989 = vmul.f32 %v1985, 1.442695
        %v1990 = vpow.pop %v1989
        %v1991 = vmul.f32 %v1986, 1.442695
        %v1992 = vpow.pop %v1991
        %v1993 = vadd.f32 %v1988, 1.0
        %v1994 = vadd.f32 %v1990, 1.0
        %v1995 = vadd.f32 %v1992, 1.0
        %v1996 = vrcp.pop %v1993
        %v1997 = vmul.f32 1.0, %v1996
        %v1998 = vrcp.pop %v1994
        %v1999 = vmul.f32 1.0, %v1998
        %v2000 = vrcp.pop %v1995
        %v2001 = vmul.f32 1.0, %v2000
        %vm2005 = vcmask 1042432
        %v2006 = vrot.slane %v1997, 5
        %v2007 = vrot.slane %v1999, 5
        %v2008 = vsel %vm2005, %v2006, %v2007
        %v2009 = vrot.slane %v2001, 5
        %v2010 = vsel %vm2005, %v2007, %v2009
        %v2013 = vmul.f32 %v393, %v2008
        %v2014 = vmul.f32 %v394, %v2010
        %vm2015 = vcmask 130048
        %2016 = vst.msk [vmem:[%s382] sm:$0xff] %vm2015, %v2013
        %2017 = vst.msk [vmem:[%s382 + $0x8] sm:$0xff] %vm2015, %v2014
        %v2018 = vld [vmem:[%s401] sm:$0xff]
        %v2019 = vld [vmem:[%s401 + $0x8] sm:$0xff]
        %v2020 = vmul.f32 %v2018, %v2008
        %v2021 = vmul.f32 %v2019, %v2010
        %s2022 = scalar_lea.vmem %s382, 16 [#allocation11]
        %2023 = vst.msk [vmem:[%s2022] sm:$0xff] %vm2015, %v2020
        %2024 = vst.msk [vmem:[%s2022 + $0x8] sm:$0xff] %vm2015, %v2021
        %v2025 = vld [vmem:[%s416] sm:$0xff]
        %v2026 = vld [vmem:[%s416 + $0x8] sm:$0xff]
        %v2027 = vmul.f32 %v2025, %v2008
        %v2028 = vmul.f32 %v2026, %v2010
        %s2029 = scalar_lea.vmem %s382, 32 [#allocation11]
        %2030 = vst.msk [vmem:[%s2029] sm:$0xff] %vm2015, %v2027
        %2031 = vst.msk [vmem:[%s2029 + $0x8] sm:$0xff] %vm2015, %v2028
        %v2032 = vld [vmem:[%s431] sm:$0xff]
        %v2033 = vld [vmem:[%s431 + $0x8] sm:$0xff]
        %v2034 = vmul.f32 %v2032, %v2008
        %v2035 = vmul.f32 %v2033, %v2010
        %s2036 = scalar_lea.vmem %s382, 48 [#allocation11]
        %2037 = vst.msk [vmem:[%s2036] sm:$0xff] %vm2015, %v2034
        %2038 = vst.msk [vmem:[%s2036 + $0x8] sm:$0xff] %vm2015, %v2035
        %s2039 = sand.u32 %s191, 1
        %s2040 = scalar_lea.sflag [#allocation5], %s2039
        %s2041 = sand.u32 %s191, 1
        %s2042 = smul.addr %s2041, 64
        %s2043 = scalar_lea.vmem [#allocation11], %s2042
        // Predicated region
        $region57: #{tpu_custom_call.1} parent=39 // pred_check
          %p2044 = pneg %p201
        $region58: #{tpu_custom_call.1} parent=39 // pred_check_branch
          %2046 = sbr.rel (%p2044) target = $region60
        $region59: #{tpu_custom_call.1} parent=39 // pred_region
          %s2047 = smul.u32 2, %s32
          %s2049 = ssub.s32 1024, 1024
          %2050 = vsyncadd %s2040, %s2049
          %s2051 = smul.addr %s31, 8
          %s2052 = sadd.s32 %s2047, %s2051
          %s2053 = smul.addr %s2052, 128
          %s2054 = scalar_lea.hbm %s5, %s2053
          %s2055 = sshll.u32 %s2043, 4
          %s2056 = int_to_ptr.vmem [resolvable:$true] %s2055
          %2061 = dma.vmem_to_hbm [thread:$0]  %s2056, 1024, %s2054, %s2040, 128, 128, 8
        $region60: #{tpu_custom_call.1} parent=39 // pred_fallthru
          _
      $region40: #{tpu_custom_call.1} parent=5 // pred_fallthru
        _
      %p2062 = scmp.le.s32.totalorder 2, %s22
      // Predicated region
      $region61: #{tpu_custom_call.1} parent=5 // pred_check
        %p2063 = pneg %p2062
      $region62: #{tpu_custom_call.1} parent=5 // pred_check_branch
        %2065 = sbr.rel (%p2063) target = $region64
      $region63: #{tpu_custom_call.1} parent=5 // pred_region
        %s2066 = ssub.s32 %s22, 2
        // Predicated region
        $region65: #{tpu_custom_call.1} parent=63 // pred_check
          %p2067 = pneg %p207
        $region66: #{tpu_custom_call.1} parent=63 // pred_check_branch
          %2069 = sbr.rel (%p2067) target = $region68
        $region67: #{tpu_custom_call.1} parent=63 // pred_region
          %s2070 = sand.u32 %s192, 1
          %s2071 = scalar_lea.sflag [#allocation5], %s2070
          %s2072 = sand.u32 %s192, 1
          %s2073 = smul.addr %s2072, 64
          %s2074 = scalar_lea.vmem [#allocation11], %s2073
          %2075 = dma.done %s2071, 1024
        $region68: #{tpu_custom_call.1} parent=63 // pred_fallthru
          _
      $region64: #{tpu_custom_call.1} parent=5 // pred_fallthru
        _
    $region6: #{tpu_custom_call.1} parent=1 // loop_footer
      %s26 = sadd.s32 1, %s22
    $region7: #{tpu_custom_call.1} parent=1 // loop_footer_branch
      %21 = sbr.rel target = $region3
    $region8: #{tpu_custom_call.1} parent=1 // loop_exit
      _
    %2076 = vsyncpa [#allocation4], 1
    %s2077 = scalar_lea.sflag [#allocation4], 1
    %2078 = vsyncpa %s2077, 1
    %2079 = vsyncpa [#allocation8], 1
    %s2080 = scalar_lea.sflag [#allocation8], 1
    %2081 = vsyncpa %s2080, 1
    %2082 = vsyncpa [#allocation5], 1
    %s2083 = scalar_lea.sflag [#allocation5], 1
    %2084 = vsyncpa %s2083, 1
    %2085 = vsyncpa [#allocation6], 1
    %s2086 = scalar_lea.sflag [#allocation6], 1
    %2087 = vsyncpa %s2086, 1

</llo_original>
